<compile_context>
chip_gen: v6e
topology: v6e:2x2x1
jax: 0.10.0
libtpu: 0.0.40
codegen_flags: <defaults>
</compile_context>

<pallas_src>
import jax
import jax.numpy as jnp
from jax.experimental import pallas as pl
from jax.experimental.pallas import tpu as pltpu


def _round_up(x, m):
    return ((x + m - 1) // m) * m


def _listener_kernel(
    x_a_ref, x_b_ref, emb_ref,
    w_se_ref, b_se_ref,          # shape encoder (shared for x_a and x_b)
    w_ft_ref, b_ft_ref,          # text projection
    w1a_ref, w1b_ref, w1e_ref, b1_ref,   # predictor layer 1, split along its 3*Bn input rows
    w2_ref, b2_ref,              # predictor layer 2 (Bn -> Bn//2), ReLU
    w3t_ref, b3_ref,             # predictor layer 3 (Bn//2 -> 1), stored transposed (1, Bn//2)
    o_ref,
):
    f32 = jnp.float32
    bf16 = jnp.bfloat16
    tb = x_a_ref.shape[0]

    # Resident weights/biases, each read once per grid step.
    w_se = w_se_ref[...]
    b_se = b_se_ref[...]
    w_ft = w_ft_ref[...]
    b_ft = b_ft_ref[...]

    # ---- Shared shape encoder: one fused (2*TILE_B, Ds) @ (Ds, Bn) MXU matmul ----
    # (sublane-axis stack of the two latents -> bigger M per weight load, no lane relayout)
    x_ab = jnp.concatenate([x_a_ref[...], x_b_ref[...]], axis=0)
    h_ab = jnp.dot(x_ab.astype(bf16), w_se, preferred_element_type=f32) + b_se
    h_a = h_ab[:tb]
    h_b = h_ab[tb:]

    # ---- Text projection ----
    h_e = jnp.dot(emb_ref[...].astype(bf16), w_ft, preferred_element_type=f32) + b_ft

    # ---- Predictor layer 1: concat-free (split-w1 partial sums), then ReLU ----
    h1 = (jnp.dot(h_a.astype(bf16), w1a_ref[...], preferred_element_type=f32)
          + jnp.dot(h_b.astype(bf16), w1b_ref[...], preferred_element_type=f32)
          + jnp.dot(h_e.astype(bf16), w1e_ref[...], preferred_element_type=f32)
          + b1_ref[...])
    h1 = jnp.maximum(h1, 0.0)

    # ---- Predictor layer 2: Linear + ReLU ----
    h2 = jnp.dot(h1.astype(bf16), w2_ref[...], preferred_element_type=f32) + b2_ref[...]
    h2 = jnp.maximum(h2, 0.0)

    # ---- Predictor layer 3 (K=Bn//2, N=1): VPU multiply + lane reduce, skip the MXU ----
    out = jnp.sum(h2 * w3t_ref[...], axis=-1, keepdims=True) + b3_ref[...]
    o_ref[...] = out.astype(o_ref.dtype)


def neural_listener_shallow(x_a, x_b, embed_ab, params, *, tile_b=256):
    """Forward pass, tiled over the batch with resident weights and pipelined activations."""
    f32, bf16 = jnp.float32, jnp.bfloat16
    B, Ds = x_a.shape
    Dt = embed_ab.shape[1]
    Bn = params["w_se"].shape[1]
    Bh = Bn // 2

    # Tile size: multiple of 8, never larger than the (8-rounded) batch.
    tile_b = _round_up(max(8, min(tile_b, _round_up(B, 8))), 8)
    Bp = _round_up(B, tile_b)
    if Bp != B:
        pad = ((0, Bp - B), (0, 0))
        x_a = jnp.pad(x_a, pad)
        x_b = jnp.pad(x_b, pad)
        embed_ab = jnp.pad(embed_ab, pad)
    num_tiles = Bp // tile_b

    # Weights in bf16 for the MXU; biases (VPU work) stay f32.
    # w1 pre-split into its three Bn-row blocks (kills the lane-axis concat);
    # w3 stored transposed so the last layer is a broadcast-mul + lane reduce.
    w_se = params["w_se"].astype(bf16)
    w_ft = params["w_ft"].astype(bf16)
    w1 = params["w1"].astype(bf16)
    w1a, w1b, w1e = w1[:Bn], w1[Bn:2 * Bn], w1[2 * Bn:]
    w2 = params["w2"].astype(bf16)
    w3t = params["w3"].astype(f32).T              # (1, Bn//2)
    b_se = params["b_se"].astype(f32)
    b_ft = params["b_ft"].astype(f32)
    b1 = params["b1"].astype(f32)
    b2 = params["b2"].astype(f32)
    b3 = params["b3"].astype(f32)                 # (1, 1)

    def row_spec(d):
        return pl.BlockSpec((tile_b, d), lambda i: (i, 0))

    def resident_spec(a):
        # Constant block index -> Pallas keeps the block VMEM-resident (no re-DMA per step).
        return pl.BlockSpec(a.shape, lambda i: (0, 0))

    args = (x_a, x_b, embed_ab,
            w_se, b_se, w_ft, b_ft,
            w1a, w1b, w1e, b1,
            w2, b2, w3t, b3)
    in_specs = [row_spec(Ds), row_spec(Ds), row_spec(Dt)] + [resident_spec(a) for a in args[3:]]

    macs_per_row = 2 * Ds * Bn + Dt * Bn + 3 * Bn * Bn + Bn * Bh + Bh
    flops = 2 * Bp * macs_per_row
    bytes_accessed = (4 * Bp * (2 * Ds + Dt)                                  # f32 activations in
                      + 2 * (2 * Ds * Bn + Dt * Bn + 3 * Bn * Bn + Bn * Bh)   # bf16 weights (approx)
                      + 4 * Bp)                                               # f32 output

    out = pl.pallas_call(
        _listener_kernel,
        out_shape=jax.ShapeDtypeStruct((Bp, 1), f32),
        grid=(num_tiles,),
        in_specs=in_specs,
        out_specs=pl.BlockSpec((tile_b, 1), lambda i: (i, 0)),
        compiler_params=pltpu.CompilerParams(
            dimension_semantics=("parallel",)),
        cost_estimate=pl.CostEstimate(
            flops=int(flops), transcendentals=0, bytes_accessed=int(bytes_accessed)),
    )(*args)
    return out[:B]


def init_params(key, shape_latent_dim, text_embed_dim, bottleneck_dim=128):
    """Deterministic synthetic parameter init (matches the torch module's layer shapes)."""
    dims = {
        "w_se": (shape_latent_dim, bottleneck_dim),
        "w_ft": (text_embed_dim, bottleneck_dim),
        "w1": (bottleneck_dim * 3, bottleneck_dim),
        "w2": (bottleneck_dim, bottleneck_dim // 2),
        "w3": (bottleneck_dim // 2, 1),
    }
    params = {}
    keys = jax.random.split(key, len(dims))
    for k, (name, shape) in zip(keys, dims.items()):
        scale = 1.0 / jnp.sqrt(jnp.float32(shape[0]))
        params[name] = jax.random.normal(k, shape, dtype=jnp.float32) * scale
        params[name.replace("w", "b")] = jnp.zeros((1, shape[1]), dtype=jnp.float32)
    return params


def reference_forward(x_a, x_b, embed_ab, p):
    """Pure-JAX reference (mirrors the torch forward, inference mode, bf16 matmul operands)."""
    f32, bf16 = jnp.float32, jnp.bfloat16

    def lin(x, w, b):
        return jnp.dot(x.astype(bf16), w.astype(bf16), preferred_element_type=f32) + b

    h_a = lin(x_a, p["w_se"], p["b_se"])
    h_b = lin(x_b, p["w_se"], p["b_se"])
    h_e = lin(embed_ab, p["w_ft"], p["b_ft"])
    h = jnp.concatenate([h_a, h_b, h_e], axis=1)
    h = jax.nn.relu(lin(h, p["w1"], p["b1"]))
    h = jax.nn.relu(lin(h, p["w2"], p["b2"]))
    return jnp.dot(h, p["w3"].astype(f32)) + p["b3"]


if __name__ == "__main__":
    # Small shapes consistent with the module: latents + text embedding + bottleneck=128.
    # B=40 with tile_b=16 exercises the batch grid (3 steps) plus the padding path.
    B = 40
    shape_latent_dim = 128
    text_embed_dim = 256
    bottleneck_dim = 128

    key = jax.random.PRNGKey(0)
    k_xa, k_xb, k_emb, k_params = jax.random.split(key, 4)

    x_a = jax.random.normal(k_xa, (B, shape_latent_dim), dtype=jnp.float32)
    x_b = jax.random.normal(k_xb, (B, shape_latent_dim), dtype=jnp.float32)
    embed_ab = jax.random.normal(k_emb, (B, text_embed_dim), dtype=jnp.float32)

    params = init_params(k_params, shape_latent_dim, text_embed_dim, bottleneck_dim)

    out = neural_listener_shallow(x_a, x_b, embed_ab, params, tile_b=16)
    out = jax.block_until_ready(out)

    ref = reference_forward(x_a, x_b, embed_ab, params)
    assert out.shape == (B, 1), out.shape
    assert jnp.allclose(out, ref, atol=5e-3, rtol=5e-3), (
        "mismatch vs. pure-JAX reference, max abs err = "
        + str(float(jnp.max(jnp.abs(out - ref)))))

    print("KERNEL_OK")
</pallas_src>

<mosaic_0001>
module attributes {stable_mosaic.version = 11 : i64} {
  func.func @_listener_kernel(%arg0: i32, %arg1: memref<16x128xf32, #tpu.memory_space<vmem>>, %arg2: memref<16x128xf32, #tpu.memory_space<vmem>>, %arg3: memref<16x256xf32, #tpu.memory_space<vmem>>, %arg4: memref<128x128xbf16, #tpu.memory_space<vmem>>, %arg5: memref<1x128xf32, #tpu.memory_space<vmem>>, %arg6: memref<256x128xbf16, #tpu.memory_space<vmem>>, %arg7: memref<1x128xf32, #tpu.memory_space<vmem>>, %arg8: memref<128x128xbf16, #tpu.memory_space<vmem>>, %arg9: memref<128x128xbf16, #tpu.memory_space<vmem>>, %arg10: memref<128x128xbf16, #tpu.memory_space<vmem>>, %arg11: memref<1x128xf32, #tpu.memory_space<vmem>>, %arg12: memref<128x64xbf16, #tpu.memory_space<vmem>>, %arg13: memref<1x64xf32, #tpu.memory_space<vmem>>, %arg14: memref<1x64xf32, #tpu.memory_space<vmem>>, %arg15: memref<1x1xf32, #tpu.memory_space<vmem>>, %arg16: memref<16x1xf32, #tpu.memory_space<vmem>>) attributes {dimension_semantics = [#tpu.dimension_semantics<parallel>], iteration_bounds = array<i64: 3>, scalar_prefetch = 0 : i64, scratch_operands = 0 : i64, tpu.core_type = #tpu.core_type<tc>, window_params = [{transform_indices = @transform_0, window_bounds = array<i64: 16, 128>}, {transform_indices = @transform_1, window_bounds = array<i64: 16, 128>}, {transform_indices = @transform_2, window_bounds = array<i64: 16, 256>}, {pipeline_mode = #tpu.pipeline_mode<synchronous>, transform_indices = @transform_3, window_bounds = array<i64: 128, 128>}, {pipeline_mode = #tpu.pipeline_mode<synchronous>, transform_indices = @transform_4, window_bounds = array<i64: 1, 128>}, {pipeline_mode = #tpu.pipeline_mode<synchronous>, transform_indices = @transform_5, window_bounds = array<i64: 256, 128>}, {pipeline_mode = #tpu.pipeline_mode<synchronous>, transform_indices = @transform_6, window_bounds = array<i64: 1, 128>}, {pipeline_mode = #tpu.pipeline_mode<synchronous>, transform_indices = @transform_7, window_bounds = array<i64: 128, 128>}, {pipeline_mode = #tpu.pipeline_mode<synchronous>, transform_indices = @transform_8, window_bounds = array<i64: 128, 128>}, {pipeline_mode = #tpu.pipeline_mode<synchronous>, transform_indices = @transform_9, window_bounds = array<i64: 128, 128>}, {pipeline_mode = #tpu.pipeline_mode<synchronous>, transform_indices = @transform_10, window_bounds = array<i64: 1, 128>}, {pipeline_mode = #tpu.pipeline_mode<synchronous>, transform_indices = @transform_11, window_bounds = array<i64: 128, 64>}, {pipeline_mode = #tpu.pipeline_mode<synchronous>, transform_indices = @transform_12, window_bounds = array<i64: 1, 64>}, {pipeline_mode = #tpu.pipeline_mode<synchronous>, transform_indices = @transform_13, window_bounds = array<i64: 1, 64>}, {pipeline_mode = #tpu.pipeline_mode<synchronous>, transform_indices = @transform_14, window_bounds = array<i64: 1, 1>}, {transform_indices = @transform_15, window_bounds = array<i64: 16, 1>}]} {
    %c0 = arith.constant 0 : index
    %c0_0 = arith.constant 0 : index
    %0 = vector.load %arg4[%c0, %c0_0] : memref<128x128xbf16, #tpu.memory_space<vmem>>, vector<128x128xbf16>
    %c0_1 = arith.constant 0 : index
    %c0_2 = arith.constant 0 : index
    %1 = vector.load %arg5[%c0_1, %c0_2] : memref<1x128xf32, #tpu.memory_space<vmem>>, vector<1x128xf32>
    %c0_3 = arith.constant 0 : index
    %c0_4 = arith.constant 0 : index
    %2 = vector.load %arg6[%c0_3, %c0_4] : memref<256x128xbf16, #tpu.memory_space<vmem>>, vector<256x128xbf16>
    %c0_5 = arith.constant 0 : index
    %c0_6 = arith.constant 0 : index
    %3 = vector.load %arg7[%c0_5, %c0_6] : memref<1x128xf32, #tpu.memory_space<vmem>>, vector<1x128xf32>
    %c0_7 = arith.constant 0 : index
    %c0_8 = arith.constant 0 : index
    %4 = vector.load %arg1[%c0_7, %c0_8] : memref<16x128xf32, #tpu.memory_space<vmem>>, vector<16x128xf32>
    %c0_9 = arith.constant 0 : index
    %c0_10 = arith.constant 0 : index
    %5 = vector.load %arg2[%c0_9, %c0_10] : memref<16x128xf32, #tpu.memory_space<vmem>>, vector<16x128xf32>
    %6 = tpu.concatenate %4, %5 in 0 : vector<16x128xf32>, vector<16x128xf32> -> vector<32x128xf32>
    %7 = arith.truncf %6 : vector<32x128xf32> to vector<32x128xbf16>
    %cst = arith.constant dense<0.000000e+00> : vector<32x128xf32>
    %8 = tpu.matmul %7, %0, %cst {dimension_numbers = #tpu.dot_dimension_numbers<[1], [0], [0], [1], [0, 0, 1, 1], [], []>} : vector<32x128xbf16>, vector<128x128xbf16>, vector<32x128xf32> -> vector<32x128xf32>
    %9 = vector.broadcast %1 : vector<1x128xf32> to vector<32x128xf32>
    %10 = arith.addf %8, %9 : vector<32x128xf32>
    %11 = vector.extract_strided_slice %10 {offsets = [0, 0], sizes = [16, 128], strides = [1, 1]} : vector<32x128xf32> to vector<16x128xf32>
    %12 = vector.extract_strided_slice %10 {offsets = [16, 0], sizes = [16, 128], strides = [1, 1]} : vector<32x128xf32> to vector<16x128xf32>
    %c0_11 = arith.constant 0 : index
    %c0_12 = arith.constant 0 : index
    %13 = vector.load %arg3[%c0_11, %c0_12] : memref<16x256xf32, #tpu.memory_space<vmem>>, vector<16x256xf32>
    %14 = arith.truncf %13 : vector<16x256xf32> to vector<16x256xbf16>
    %cst_13 = arith.constant dense<0.000000e+00> : vector<16x128xf32>
    %15 = tpu.matmul %14, %2, %cst_13 {dimension_numbers = #tpu.dot_dimension_numbers<[1], [0], [0], [1], [0, 0, 1, 1], [], []>} : vector<16x256xbf16>, vector<256x128xbf16>, vector<16x128xf32> -> vector<16x128xf32>
    %16 = vector.broadcast %3 : vector<1x128xf32> to vector<16x128xf32>
    %17 = arith.addf %15, %16 : vector<16x128xf32>
    %18 = arith.truncf %11 : vector<16x128xf32> to vector<16x128xbf16>
    %c0_14 = arith.constant 0 : index
    %c0_15 = arith.constant 0 : index
    %19 = vector.load %arg8[%c0_14, %c0_15] : memref<128x128xbf16, #tpu.memory_space<vmem>>, vector<128x128xbf16>
    %cst_16 = arith.constant dense<0.000000e+00> : vector<16x128xf32>
    %20 = tpu.matmul %18, %19, %cst_16 {dimension_numbers = #tpu.dot_dimension_numbers<[1], [0], [0], [1], [0, 0, 1, 1], [], []>} : vector<16x128xbf16>, vector<128x128xbf16>, vector<16x128xf32> -> vector<16x128xf32>
    %21 = arith.truncf %12 : vector<16x128xf32> to vector<16x128xbf16>
    %c0_17 = arith.constant 0 : index
    %c0_18 = arith.constant 0 : index
    %22 = vector.load %arg9[%c0_17, %c0_18] : memref<128x128xbf16, #tpu.memory_space<vmem>>, vector<128x128xbf16>
    %cst_19 = arith.constant dense<0.000000e+00> : vector<16x128xf32>
    %23 = tpu.matmul %21, %22, %cst_19 {dimension_numbers = #tpu.dot_dimension_numbers<[1], [0], [0], [1], [0, 0, 1, 1], [], []>} : vector<16x128xbf16>, vector<128x128xbf16>, vector<16x128xf32> -> vector<16x128xf32>
    %24 = arith.addf %20, %23 : vector<16x128xf32>
    %25 = arith.truncf %17 : vector<16x128xf32> to vector<16x128xbf16>
    %c0_20 = arith.constant 0 : index
    %c0_21 = arith.constant 0 : index
    %26 = vector.load %arg10[%c0_20, %c0_21] : memref<128x128xbf16, #tpu.memory_space<vmem>>, vector<128x128xbf16>
    %cst_22 = arith.constant dense<0.000000e+00> : vector<16x128xf32>
    %27 = tpu.matmul %25, %26, %cst_22 {dimension_numbers = #tpu.dot_dimension_numbers<[1], [0], [0], [1], [0, 0, 1, 1], [], []>} : vector<16x128xbf16>, vector<128x128xbf16>, vector<16x128xf32> -> vector<16x128xf32>
    %28 = arith.addf %24, %27 : vector<16x128xf32>
    %c0_23 = arith.constant 0 : index
    %c0_24 = arith.constant 0 : index
    %29 = vector.load %arg11[%c0_23, %c0_24] : memref<1x128xf32, #tpu.memory_space<vmem>>, vector<1x128xf32>
    %30 = vector.broadcast %29 : vector<1x128xf32> to vector<16x128xf32>
    %31 = arith.addf %28, %30 : vector<16x128xf32>
    %cst_25 = arith.constant 0.000000e+00 : f32
    %32 = vector.broadcast %cst_25 : f32 to vector<16x128xf32>
    %33 = arith.maximumf %31, %32 : vector<16x128xf32>
    %34 = arith.truncf %33 : vector<16x128xf32> to vector<16x128xbf16>
    %c0_26 = arith.constant 0 : index
    %c0_27 = arith.constant 0 : index
    %35 = vector.load %arg12[%c0_26, %c0_27] : memref<128x64xbf16, #tpu.memory_space<vmem>>, vector<128x64xbf16>
    %cst_28 = arith.constant dense<0.000000e+00> : vector<16x64xf32>
    %36 = tpu.matmul %34, %35, %cst_28 {dimension_numbers = #tpu.dot_dimension_numbers<[1], [0], [0], [1], [0, 0, 1, 1], [], []>} : vector<16x128xbf16>, vector<128x64xbf16>, vector<16x64xf32> -> vector<16x64xf32>
    %c0_29 = arith.constant 0 : index
    %c0_30 = arith.constant 0 : index
    %37 = vector.load %arg13[%c0_29, %c0_30] : memref<1x64xf32, #tpu.memory_space<vmem>>, vector<1x64xf32>
    %38 = vector.broadcast %37 : vector<1x64xf32> to vector<16x64xf32>
    %39 = arith.addf %36, %38 : vector<16x64xf32>
    %cst_31 = arith.constant 0.000000e+00 : f32
    %40 = vector.broadcast %cst_31 : f32 to vector<16x64xf32>
    %41 = arith.maximumf %39, %40 : vector<16x64xf32>
    %c0_32 = arith.constant 0 : index
    %c0_33 = arith.constant 0 : index
    %42 = vector.load %arg14[%c0_32, %c0_33] : memref<1x64xf32, #tpu.memory_space<vmem>>, vector<1x64xf32>
    %43 = vector.broadcast %42 : vector<1x64xf32> to vector<16x64xf32>
    %44 = arith.mulf %41, %43 : vector<16x64xf32>
    %cst_34 = arith.constant dense<0.000000e+00> : vector<16xf32>
    %45 = vector.multi_reduction <add>, %44, %cst_34 [1] : vector<16x64xf32> to vector<16xf32>
    %46 = vector.shape_cast %45 : vector<16xf32> to vector<16x1xf32>
    %c0_35 = arith.constant 0 : index
    %c0_36 = arith.constant 0 : index
    %47 = vector.load %arg15[%c0_35, %c0_36] : memref<1x1xf32, #tpu.memory_space<vmem>>, vector<1x1xf32>
    %48 = vector.broadcast %47 : vector<1x1xf32> to vector<16x1xf32>
    %49 = arith.addf %46, %48 : vector<16x1xf32>
    %c0_37 = arith.constant 0 : index
    %c0_38 = arith.constant 0 : index
    %50 = vector.load %arg16[%c0_37, %c0_38] : memref<16x1xf32, #tpu.memory_space<vmem>>, vector<16x1xf32>
    tpu.vector_store %arg16[%c0_37, %c0_38], %49 {strides = array<i32>} : memref<16x1xf32, #tpu.memory_space<vmem>>, vector<16x1xf32>,
    return
  }
  func.func @transform_0(%arg0: i32) -> (i32, i32) {
    %c0_i32 = arith.constant 0 : i32
    %c0_i32_0 = arith.constant 0 : i32
    return %arg0, %c0_i32 : i32, i32
  }
  func.func @transform_1(%arg0: i32) -> (i32, i32) {
    %c0_i32 = arith.constant 0 : i32
    %c0_i32_0 = arith.constant 0 : i32
    return %arg0, %c0_i32 : i32, i32
  }
  func.func @transform_2(%arg0: i32) -> (i32, i32) {
    %c0_i32 = arith.constant 0 : i32
    %c0_i32_0 = arith.constant 0 : i32
    return %arg0, %c0_i32 : i32, i32
  }
  func.func @transform_3(%arg0: i32) -> (i32, i32) {
    %c0_i32 = arith.constant 0 : i32
    %c0_i32_0 = arith.constant 0 : i32
    %c0_i32_1 = arith.constant 0 : i32
    return %c0_i32, %c0_i32_0 : i32, i32
  }
  func.func @transform_4(%arg0: i32) -> (i32, i32) {
    %c0_i32 = arith.constant 0 : i32
    %c0_i32_0 = arith.constant 0 : i32
    %c0_i32_1 = arith.constant 0 : i32
    return %c0_i32, %c0_i32_0 : i32, i32
  }
  func.func @transform_5(%arg0: i32) -> (i32, i32) {
    %c0_i32 = arith.constant 0 : i32
    %c0_i32_0 = arith.constant 0 : i32
    %c0_i32_1 = arith.constant 0 : i32
    return %c0_i32, %c0_i32_0 : i32, i32
  }
  func.func @transform_6(%arg0: i32) -> (i32, i32) {
    %c0_i32 = arith.constant 0 : i32
    %c0_i32_0 = arith.constant 0 : i32
    %c0_i32_1 = arith.constant 0 : i32
    return %c0_i32, %c0_i32_0 : i32, i32
  }
  func.func @transform_7(%arg0: i32) -> (i32, i32) {
    %c0_i32 = arith.constant 0 : i32
    %c0_i32_0 = arith.constant 0 : i32
    %c0_i32_1 = arith.constant 0 : i32
    return %c0_i32, %c0_i32_0 : i32, i32
  }
  func.func @transform_8(%arg0: i32) -> (i32, i32) {
    %c0_i32 = arith.constant 0 : i32
    %c0_i32_0 = arith.constant 0 : i32
    %c0_i32_1 = arith.constant 0 : i32
    return %c0_i32, %c0_i32_0 : i32, i32
  }
  func.func @transform_9(%arg0: i32) -> (i32, i32) {
    %c0_i32 = arith.constant 0 : i32
    %c0_i32_0 = arith.constant 0 : i32
    %c0_i32_1 = arith.constant 0 : i32
    return %c0_i32, %c0_i32_0 : i32, i32
  }
  func.func @transform_10(%arg0: i32) -> (i32, i32) {
    %c0_i32 = arith.constant 0 : i32
    %c0_i32_0 = arith.constant 0 : i32
    %c0_i32_1 = arith.constant 0 : i32
    return %c0_i32, %c0_i32_0 : i32, i32
  }
  func.func @transform_11(%arg0: i32) -> (i32, i32) {
    %c0_i32 = arith.constant 0 : i32
    %c0_i32_0 = arith.constant 0 : i32
    %c0_i32_1 = arith.constant 0 : i32
    return %c0_i32, %c0_i32_0 : i32, i32
  }
  func.func @transform_12(%arg0: i32) -> (i32, i32) {
    %c0_i32 = arith.constant 0 : i32
    %c0_i32_0 = arith.constant 0 : i32
    %c0_i32_1 = arith.constant 0 : i32
    return %c0_i32, %c0_i32_0 : i32, i32
  }
  func.func @transform_13(%arg0: i32) -> (i32, i32) {
    %c0_i32 = arith.constant 0 : i32
    %c0_i32_0 = arith.constant 0 : i32
    %c0_i32_1 = arith.constant 0 : i32
    return %c0_i32, %c0_i32_0 : i32, i32
  }
  func.func @transform_14(%arg0: i32) -> (i32, i32) {
    %c0_i32 = arith.constant 0 : i32
    %c0_i32_0 = arith.constant 0 : i32
    %c0_i32_1 = arith.constant 0 : i32
    return %c0_i32, %c0_i32_0 : i32, i32
  }
  func.func @transform_15(%arg0: i32) -> (i32, i32) {
    %c0_i32 = arith.constant 0 : i32
    %c0_i32_0 = arith.constant 0 : i32
    return %arg0, %c0_i32 : i32, i32
  }
}

</mosaic_0001>

<llo_original>
// kernel: tpu_custom_call.1
$region0: #{tpu_custom_call.1}
  #allocation0 [shape = 'u32[]', space=smem, size = 0x4, offset = 0x4, fixed_abs, tag = 'smem constant byte address 0x4 - core index']
  #allocation1 [shape = 'u32[144,128]{1,0:T(1,128)}', space=vmem, size = 0x12000, scoped, tag = 'internal scratch']
  #allocation2 [shape = 'f32[1,1]{1,0:T(1,128)S(1)}', space=vmem, size = 0x200, scoped, tag = 'scoped memory for tpu_custom_call.1']
  %s0 = inlined_call_operand.hbm [shape: f32[48,128], index: 0, kind: input, shape index: {}]
  %s1 = inlined_call_operand.hbm [shape: f32[48,128], index: 1, kind: input, shape index: {}]
  %s2 = inlined_call_operand.vmem [shape: f32[48,256], index: 2, kind: input, shape index: {}]
  %s3 = inlined_call_operand.hbm [shape: bf16[128,128], index: 3, kind: input, shape index: {}]
  %s4 = inlined_call_operand.vmem [shape: f32[1,128], index: 4, kind: input, shape index: {}]
  %s5 = inlined_call_operand.hbm [shape: bf16[256,128], index: 5, kind: input, shape index: {}]
  %s6 = inlined_call_operand.vmem [shape: f32[1,128], index: 6, kind: input, shape index: {}]
  %s7 = inlined_call_operand.hbm [shape: bf16[128,128], index: 7, kind: input, shape index: {}]
  %s8 = inlined_call_operand.hbm [shape: bf16[128,128], index: 8, kind: input, shape index: {}]
  %s9 = inlined_call_operand.hbm [shape: bf16[128,128], index: 9, kind: input, shape index: {}]
  %s10 = inlined_call_operand.vmem [shape: f32[1,128], index: 10, kind: input, shape index: {}]
  %s11 = inlined_call_operand.vmem [shape: bf16[128,64], index: 11, kind: input, shape index: {}]
  %s12 = inlined_call_operand.vmem [shape: f32[1,64], index: 12, kind: input, shape index: {}]
  %s13 = inlined_call_operand.vmem [shape: f32[1,64], index: 13, kind: input, shape index: {}]
  %s14 = inlined_call_operand.<no memory space> [shape: f32[1,1], index: 14, kind: input, shape index: {}]
  %s15 = inlined_call_operand.vmem [shape: f32[48,1], index: 15, kind: output, shape index: {}]
  %s16 = sld [smem:[#allocation0]]
  $region121: #{tpu_custom_call.1} parent=0
    _
  %s18 = ssub.s32 1, %s16
  %s19 = scalar_select 0, %s18, %s16
  %v20 = vstv %s14
  %21 = vst [vmem:[#allocation2] sm:$0x1] %v20
  $region1: #{tpu_custom_call.1} parent=0
    #allocation3 [shape = 'u8[16384]{0}', space=vmem, size = 0x4000, scoped, tag = 'input window, operand 0']
    #allocation4 [shape = 's32[2]{0}', space=sflag, size = 0x8, scoped, tag = 'scoped memory for tpu_custom_call.1']
    #allocation5 [shape = 'u8[16384]{0}', space=vmem, size = 0x4000, scoped, tag = 'input window, operand 1']
    #allocation6 [shape = 's32[2]{0}', space=sflag, size = 0x8, scoped, tag = 'scoped memory for tpu_custom_call.1']
    #allocation7 [shape = 'u8[32768]{0}', space=vmem, size = 0x8000, scoped, tag = 'input window, operand 3, single buffered']
    #allocation8 [shape = 'u8[65536]{0}', space=vmem, size = 0x10000, scoped, tag = 'input window, operand 5, single buffered']
    #allocation9 [shape = 's32[1]{0}', space=sflag, size = 0x4, scoped, tag = 'scoped memory for tpu_custom_call.1']
    #allocation10 [shape = 'u8[32768]{0}', space=vmem, size = 0x8000, scoped, tag = 'input window, operand 7, single buffered']
    #allocation11 [shape = 'u8[32768]{0}', space=vmem, size = 0x8000, scoped, tag = 'input window, operand 8, single buffered']
    #allocation12 [shape = 's32[1]{0}', space=sflag, size = 0x4, scoped, tag = 'scoped memory for tpu_custom_call.1']
    #allocation13 [shape = 'u8[32768]{0}', space=vmem, size = 0x8000, scoped, tag = 'input window, operand 9, single buffered']
    %22 = vsyncpa [#allocation4], 0
    %s23 = scalar_lea.sflag [#allocation4], 1
    %24 = vsyncpa %s23, 0
    %25 = vsyncpa [#allocation6], 0
    %s26 = scalar_lea.sflag [#allocation6], 1
    %27 = vsyncpa %s26, 0
    %28 = vsyncpa [#allocation9], 0
    %29 = vsyncpa [#allocation12], 0
    loop: start=0, step=1, limit=5
    $region2: #{tpu_custom_call.1} parent=1 // loop_pre_header
      _
    $region3: #{tpu_custom_call.1} parent=1 // loop_header
      %s31 = sphi 0, %s35
      %p32 = scmp.ge.s32.totalorder %s31, 5
      %s41 = sphi 0, %s43
      %s44 = sphi 0, %s41
      %s45 = sphi 0, %s44
      %s61 = sphi 0, %s45
      %s67 = sphi 0, %s69
      %s70 = sphi 0, %s67
      %s71 = sphi 0, %s70
      %s87 = sphi 0, %s71
      %s93 = sphi 0, %s95
      %s96 = sphi 0, %s93
      %s97 = sphi 0, %s96
      %s113 = sphi 0, %s97
      %s117 = sphi 0, %s117
      %s119 = sphi 0, %s117
      %s120 = sphi 0, %s119
      %s134 = sphi 0, %s120
      %s138 = sphi 0, %s138
      %s140 = sphi 0, %s138
      %s141 = sphi 0, %s140
      %s155 = sphi 0, %s141
      %s159 = sphi 0, %s159
      %s161 = sphi 0, %s159
      %s162 = sphi 0, %s161
      %s176 = sphi 0, %s162
      %s180 = sphi 0, %s180
      %s182 = sphi 0, %s180
      %s183 = sphi 0, %s182
      %s197 = sphi 0, %s183
      %s201 = sphi 0, %s201
      %s203 = sphi 0, %s201
      %s204 = sphi 0, %s203
      %s218 = sphi 0, %s204
      %s222 = sphi 0, %s222
      %s224 = sphi 0, %s222
      %s225 = sphi 0, %s224
      %s239 = sphi 0, %s225
      %s243 = sphi 0, %s243
      %s245 = sphi 0, %s243
      %s246 = sphi 0, %s245
      %s260 = sphi 0, %s246
      %s264 = sphi 0, %s264
      %s266 = sphi 0, %s264
      %s267 = sphi 0, %s266
      %s281 = sphi 0, %s267
      %s285 = sphi 0, %s285
      %s287 = sphi 0, %s285
      %s288 = sphi 0, %s287
      %s302 = sphi 0, %s288
      %s306 = sphi 0, %s306
      %s308 = sphi 0, %s306
      %s309 = sphi 0, %s308
      %s323 = sphi 0, %s309
      %s327 = sphi 0, %s327
      %s329 = sphi 0, %s327
      %s330 = sphi 0, %s329
      %s344 = sphi 0, %s330
      %s348 = sphi 0, %s348
      %s350 = sphi 0, %s348
      %s351 = sphi 0, %s350
      %s365 = sphi 0, %s351
      %s371 = sphi 0, %s373
      %s374 = sphi 0, %s371
      %s375 = sphi 0, %s374
      %s391 = sphi 0, %s375
    $region4: #{tpu_custom_call.1} parent=1 // loop_header_branch
      %34 = sbr.rel (%p32) target = $region8
    $region5: #{tpu_custom_call.1} parent=1 // loop_body
      %s36 = ssub.s32 %s31, 1
      %s37 = ssub.s32 %s31, 2
      %s38 = sadd.s32 %s31, 1
      %s39 = ssub.s32 %s31, %s38
      %p40 = scmp.eq.s32.totalorder %s39, 0
      %s42 = sadd.s32 %s41, 1
      %s43 = scalar_select %p40, %s41, %s42
      %p46 = pneg %p40
      %p47 = scmp.eq.s32.totalorder %s31, 2
      %p48 = por %p46, %p47
      %p49 = scmp.ne.s32.totalorder %s41, %s44
      %p50 = scmp.eq.s32.totalorder %s31, 0
      %p51 = por %p49, %p50
      %p52 = scmp.ne.s32.totalorder %s41, %s44
      %p53 = scmp.eq.s32.totalorder %s36, 2
      %p54 = por %p52, %p53
      %p55 = scmp.ne.s32.totalorder %s44, %s45
      %p56 = scmp.eq.s32.totalorder %s36, 0
      %p57 = por %p55, %p56
      %p58 = scmp.ne.s32.totalorder %s44, %s45
      %p59 = scmp.eq.s32.totalorder %s37, 2
      %p60 = por %p58, %p59
      %p62 = scmp.ne.s32.totalorder %s45, %s61
      %p63 = scmp.eq.s32.totalorder %s37, 0
      %p64 = por %p62, %p63
      %s65 = ssub.s32 %s31, %s38
      %p66 = scmp.eq.s32.totalorder %s65, 0
      %s68 = sadd.s32 %s67, 1
      %s69 = scalar_select %p66, %s67, %s68
      %p72 = pneg %p66
      %p73 = scmp.eq.s32.totalorder %s31, 2
      %p74 = por %p72, %p73
      %p75 = scmp.ne.s32.totalorder %s67, %s70
      %p76 = scmp.eq.s32.totalorder %s31, 0
      %p77 = por %p75, %p76
      %p78 = scmp.ne.s32.totalorder %s67, %s70
      %p79 = scmp.eq.s32.totalorder %s36, 2
      %p80 = por %p78, %p79
      %p81 = scmp.ne.s32.totalorder %s70, %s71
      %p82 = scmp.eq.s32.totalorder %s36, 0
      %p83 = por %p81, %p82
      %p84 = scmp.ne.s32.totalorder %s70, %s71
      %p85 = scmp.eq.s32.totalorder %s37, 2
      %p86 = por %p84, %p85
      %p88 = scmp.ne.s32.totalorder %s71, %s87
      %p89 = scmp.eq.s32.totalorder %s37, 0
      %p90 = por %p88, %p89
      %s91 = ssub.s32 %s31, %s38
      %p92 = scmp.eq.s32.totalorder %s91, 0
      %s94 = sadd.s32 %s93, 1
      %s95 = scalar_select %p92, %s93, %s94
      %p98 = pneg %p92
      %p99 = scmp.eq.s32.totalorder %s31, 2
      %p100 = por %p98, %p99
      %p101 = scmp.ne.s32.totalorder %s93, %s96
      %p102 = scmp.eq.s32.totalorder %s31, 0
      %p103 = por %p101, %p102
      %p104 = scmp.ne.s32.totalorder %s93, %s96
      %p105 = scmp.eq.s32.totalorder %s36, 2
      %p106 = por %p104, %p105
      %p107 = scmp.ne.s32.totalorder %s96, %s97
      %p108 = scmp.eq.s32.totalorder %s36, 0
      %p109 = por %p107, %p108
      %p110 = scmp.ne.s32.totalorder %s96, %s97
      %p111 = scmp.eq.s32.totalorder %s37, 2
      %p112 = por %p110, %p111
      %p114 = scmp.ne.s32.totalorder %s97, %s113
      %p115 = scmp.eq.s32.totalorder %s37, 0
      %p116 = por %p114, %p115
      %s118 = sadd.s32 %s117, 1
      %p121 = scmp.eq.s32.totalorder %s31, 2
      %p122 = scmp.ne.s32.totalorder %s117, %s119
      %p123 = scmp.eq.s32.totalorder %s31, 0
      %p124 = por %p122, %p123
      %p125 = scmp.ne.s32.totalorder %s117, %s119
      %p126 = scmp.eq.s32.totalorder %s36, 2
      %p127 = por %p125, %p126
      %p128 = scmp.ne.s32.totalorder %s119, %s120
      %p129 = scmp.eq.s32.totalorder %s36, 0
      %p130 = por %p128, %p129
      %p131 = scmp.ne.s32.totalorder %s119, %s120
      %p132 = scmp.eq.s32.totalorder %s37, 2
      %p133 = por %p131, %p132
      %p135 = scmp.ne.s32.totalorder %s120, %s134
      %p136 = scmp.eq.s32.totalorder %s37, 0
      %p137 = por %p135, %p136
      %s139 = sadd.s32 %s138, 1
      %p142 = scmp.eq.s32.totalorder %s31, 2
      %p143 = scmp.ne.s32.totalorder %s138, %s140
      %p144 = scmp.eq.s32.totalorder %s31, 0
      %p145 = por %p143, %p144
      %p146 = scmp.ne.s32.totalorder %s138, %s140
      %p147 = scmp.eq.s32.totalorder %s36, 2
      %p148 = por %p146, %p147
      %p149 = scmp.ne.s32.totalorder %s140, %s141
      %p150 = scmp.eq.s32.totalorder %s36, 0
      %p151 = por %p149, %p150
      %p152 = scmp.ne.s32.totalorder %s140, %s141
      %p153 = scmp.eq.s32.totalorder %s37, 2
      %p154 = por %p152, %p153
      %p156 = scmp.ne.s32.totalorder %s141, %s155
      %p157 = scmp.eq.s32.totalorder %s37, 0
      %p158 = por %p156, %p157
      %s160 = sadd.s32 %s159, 1
      %p163 = scmp.eq.s32.totalorder %s31, 2
      %p164 = scmp.ne.s32.totalorder %s159, %s161
      %p165 = scmp.eq.s32.totalorder %s31, 0
      %p166 = por %p164, %p165
      %p167 = scmp.ne.s32.totalorder %s159, %s161
      %p168 = scmp.eq.s32.totalorder %s36, 2
      %p169 = por %p167, %p168
      %p170 = scmp.ne.s32.totalorder %s161, %s162
      %p171 = scmp.eq.s32.totalorder %s36, 0
      %p172 = por %p170, %p171
      %p173 = scmp.ne.s32.totalorder %s161, %s162
      %p174 = scmp.eq.s32.totalorder %s37, 2
      %p175 = por %p173, %p174
      %p177 = scmp.ne.s32.totalorder %s162, %s176
      %p178 = scmp.eq.s32.totalorder %s37, 0
      %p179 = por %p177, %p178
      %s181 = sadd.s32 %s180, 1
      %p184 = scmp.eq.s32.totalorder %s31, 2
      %p185 = scmp.ne.s32.totalorder %s180, %s182
      %p186 = scmp.eq.s32.totalorder %s31, 0
      %p187 = por %p185, %p186
      %p188 = scmp.ne.s32.totalorder %s180, %s182
      %p189 = scmp.eq.s32.totalorder %s36, 2
      %p190 = por %p188, %p189
      %p191 = scmp.ne.s32.totalorder %s182, %s183
      %p192 = scmp.eq.s32.totalorder %s36, 0
      %p193 = por %p191, %p192
      %p194 = scmp.ne.s32.totalorder %s182, %s183
      %p195 = scmp.eq.s32.totalorder %s37, 2
      %p196 = por %p194, %p195
      %p198 = scmp.ne.s32.totalorder %s183, %s197
      %p199 = scmp.eq.s32.totalorder %s37, 0
      %p200 = por %p198, %p199
      %s202 = sadd.s32 %s201, 1
      %p205 = scmp.eq.s32.totalorder %s31, 2
      %p206 = scmp.ne.s32.totalorder %s201, %s203
      %p207 = scmp.eq.s32.totalorder %s31, 0
      %p208 = por %p206, %p207
      %p209 = scmp.ne.s32.totalorder %s201, %s203
      %p210 = scmp.eq.s32.totalorder %s36, 2
      %p211 = por %p209, %p210
      %p212 = scmp.ne.s32.totalorder %s203, %s204
      %p213 = scmp.eq.s32.totalorder %s36, 0
      %p214 = por %p212, %p213
      %p215 = scmp.ne.s32.totalorder %s203, %s204
      %p216 = scmp.eq.s32.totalorder %s37, 2
      %p217 = por %p215, %p216
      %p219 = scmp.ne.s32.totalorder %s204, %s218
      %p220 = scmp.eq.s32.totalorder %s37, 0
      %p221 = por %p219, %p220
      %s223 = sadd.s32 %s222, 1
      %p226 = scmp.eq.s32.totalorder %s31, 2
      %p227 = scmp.ne.s32.totalorder %s222, %s224
      %p228 = scmp.eq.s32.totalorder %s31, 0
      %p229 = por %p227, %p228
      %p230 = scmp.ne.s32.totalorder %s222, %s224
      %p231 = scmp.eq.s32.totalorder %s36, 2
      %p232 = por %p230, %p231
      %p233 = scmp.ne.s32.totalorder %s224, %s225
      %p234 = scmp.eq.s32.totalorder %s36, 0
      %p235 = por %p233, %p234
      %p236 = scmp.ne.s32.totalorder %s224, %s225
      %p237 = scmp.eq.s32.totalorder %s37, 2
      %p238 = por %p236, %p237
      %p240 = scmp.ne.s32.totalorder %s225, %s239
      %p241 = scmp.eq.s32.totalorder %s37, 0
      %p242 = por %p240, %p241
      %s244 = sadd.s32 %s243, 1
      %p247 = scmp.eq.s32.totalorder %s31, 2
      %p248 = scmp.ne.s32.totalorder %s243, %s245
      %p249 = scmp.eq.s32.totalorder %s31, 0
      %p250 = por %p248, %p249
      %p251 = scmp.ne.s32.totalorder %s243, %s245
      %p252 = scmp.eq.s32.totalorder %s36, 2
      %p253 = por %p251, %p252
      %p254 = scmp.ne.s32.totalorder %s245, %s246
      %p255 = scmp.eq.s32.totalorder %s36, 0
      %p256 = por %p254, %p255
      %p257 = scmp.ne.s32.totalorder %s245, %s246
      %p258 = scmp.eq.s32.totalorder %s37, 2
      %p259 = por %p257, %p258
      %p261 = scmp.ne.s32.totalorder %s246, %s260
      %p262 = scmp.eq.s32.totalorder %s37, 0
      %p263 = por %p261, %p262
      %s265 = sadd.s32 %s264, 1
      %p268 = scmp.eq.s32.totalorder %s31, 2
      %p269 = scmp.ne.s32.totalorder %s264, %s266
      %p270 = scmp.eq.s32.totalorder %s31, 0
      %p271 = por %p269, %p270
      %p272 = scmp.ne.s32.totalorder %s264, %s266
      %p273 = scmp.eq.s32.totalorder %s36, 2
      %p274 = por %p272, %p273
      %p275 = scmp.ne.s32.totalorder %s266, %s267
      %p276 = scmp.eq.s32.totalorder %s36, 0
      %p277 = por %p275, %p276
      %p278 = scmp.ne.s32.totalorder %s266, %s267
      %p279 = scmp.eq.s32.totalorder %s37, 2
      %p280 = por %p278, %p279
      %p282 = scmp.ne.s32.totalorder %s267, %s281
      %p283 = scmp.eq.s32.totalorder %s37, 0
      %p284 = por %p282, %p283
      %s286 = sadd.s32 %s285, 1
      %p289 = scmp.eq.s32.totalorder %s31, 2
      %p290 = scmp.ne.s32.totalorder %s285, %s287
      %p291 = scmp.eq.s32.totalorder %s31, 0
      %p292 = por %p290, %p291
      %p293 = scmp.ne.s32.totalorder %s285, %s287
      %p294 = scmp.eq.s32.totalorder %s36, 2
      %p295 = por %p293, %p294
      %p296 = scmp.ne.s32.totalorder %s287, %s288
      %p297 = scmp.eq.s32.totalorder %s36, 0
      %p298 = por %p296, %p297
      %p299 = scmp.ne.s32.totalorder %s287, %s288
      %p300 = scmp.eq.s32.totalorder %s37, 2
      %p301 = por %p299, %p300
      %p303 = scmp.ne.s32.totalorder %s288, %s302
      %p304 = scmp.eq.s32.totalorder %s37, 0
      %p305 = por %p303, %p304
      %s307 = sadd.s32 %s306, 1
      %p310 = scmp.eq.s32.totalorder %s31, 2
      %p311 = scmp.ne.s32.totalorder %s306, %s308
      %p312 = scmp.eq.s32.totalorder %s31, 0
      %p313 = por %p311, %p312
      %p314 = scmp.ne.s32.totalorder %s306, %s308
      %p315 = scmp.eq.s32.totalorder %s36, 2
      %p316 = por %p314, %p315
      %p317 = scmp.ne.s32.totalorder %s308, %s309
      %p318 = scmp.eq.s32.totalorder %s36, 0
      %p319 = por %p317, %p318
      %p320 = scmp.ne.s32.totalorder %s308, %s309
      %p321 = scmp.eq.s32.totalorder %s37, 2
      %p322 = por %p320, %p321
      %p324 = scmp.ne.s32.totalorder %s309, %s323
      %p325 = scmp.eq.s32.totalorder %s37, 0
      %p326 = por %p324, %p325
      %s328 = sadd.s32 %s327, 1
      %p331 = scmp.eq.s32.totalorder %s31, 2
      %p332 = scmp.ne.s32.totalorder %s327, %s329
      %p333 = scmp.eq.s32.totalorder %s31, 0
      %p334 = por %p332, %p333
      %p335 = scmp.ne.s32.totalorder %s327, %s329
      %p336 = scmp.eq.s32.totalorder %s36, 2
      %p337 = por %p335, %p336
      %p338 = scmp.ne.s32.totalorder %s329, %s330
      %p339 = scmp.eq.s32.totalorder %s36, 0
      %p340 = por %p338, %p339
      %p341 = scmp.ne.s32.totalorder %s329, %s330
      %p342 = scmp.eq.s32.totalorder %s37, 2
      %p343 = por %p341, %p342
      %p345 = scmp.ne.s32.totalorder %s330, %s344
      %p346 = scmp.eq.s32.totalorder %s37, 0
      %p347 = por %p345, %p346
      %s349 = sadd.s32 %s348, 1
      %p352 = scmp.eq.s32.totalorder %s31, 2
      %p353 = scmp.ne.s32.totalorder %s348, %s350
      %p354 = scmp.eq.s32.totalorder %s31, 0
      %p355 = por %p353, %p354
      %p356 = scmp.ne.s32.totalorder %s348, %s350
      %p357 = scmp.eq.s32.totalorder %s36, 2
      %p358 = por %p356, %p357
      %p359 = scmp.ne.s32.totalorder %s350, %s351
      %p360 = scmp.eq.s32.totalorder %s36, 0
      %p361 = por %p359, %p360
      %p362 = scmp.ne.s32.totalorder %s350, %s351
      %p363 = scmp.eq.s32.totalorder %s37, 2
      %p364 = por %p362, %p363
      %p366 = scmp.ne.s32.totalorder %s351, %s365
      %p367 = scmp.eq.s32.totalorder %s37, 0
      %p368 = por %p366, %p367
      %s369 = ssub.s32 %s31, %s38
      %p370 = scmp.eq.s32.totalorder %s369, 0
      %s372 = sadd.s32 %s371, 1
      %s373 = scalar_select %p370, %s371, %s372
      %p376 = pneg %p370
      %p377 = scmp.eq.s32.totalorder %s31, 2
      %p378 = por %p376, %p377
      %p379 = scmp.ne.s32.totalorder %s371, %s374
      %p380 = scmp.eq.s32.totalorder %s31, 0
      %p381 = por %p379, %p380
      %p382 = scmp.ne.s32.totalorder %s371, %s374
      %p383 = scmp.eq.s32.totalorder %s36, 2
      %p384 = por %p382, %p383
      %p385 = scmp.ne.s32.totalorder %s374, %s375
      %p386 = scmp.eq.s32.totalorder %s36, 0
      %p387 = por %p385, %p386
      %p388 = scmp.ne.s32.totalorder %s374, %s375
      %p389 = scmp.eq.s32.totalorder %s37, 2
      %p390 = por %p388, %p389
      %p392 = scmp.ne.s32.totalorder %s375, %s391
      %p393 = scmp.eq.s32.totalorder %s37, 0
      %p394 = por %p392, %p393
      %p395 = scmp.le.s32.totalorder 1, %s31
      %p396 = scmp.lt.s32.totalorder %s31, 4
      %p397 = pnand %p395, %p396
      %p398 = pneg %p397
      // Predicated region
      $region9: #{tpu_custom_call.1} parent=5 // pred_check
        _
      $region10: #{tpu_custom_call.1} parent=5 // pred_check_branch
        %400 = sbr.rel (%p397) target = $region12
      $region11: #{tpu_custom_call.1} parent=5 // pred_region
        %s401 = ssub.s32 %s31, 1
        // Predicated region
        $region13: #{tpu_custom_call.1} parent=11 // pred_check
          %p402 = pneg %p130
        $region14: #{tpu_custom_call.1} parent=11 // pred_check_branch
          %404 = sbr.rel (%p402) target = $region16
        $region15: #{tpu_custom_call.1} parent=11 // pred_region
          %s406 = ssub.s32 1024, 1024
          %407 = vsyncadd [#allocation6], %s406
          %s408 = sshll.u32 [#allocation7], 4
          %s409 = int_to_ptr.vmem [resolvable:$true] %s408
          %414 = dma.hbm_to_vmem [thread:$0]  %s3, 1024, %s409, [#allocation6], 64, 64, 4
        $region16: #{tpu_custom_call.1} parent=11 // pred_fallthru
          _
        // Predicated region
        $region17: #{tpu_custom_call.1} parent=11 // pred_check
          %p415 = pneg %p151
        $region18: #{tpu_custom_call.1} parent=11 // pred_check_branch
          %417 = sbr.rel (%p415) target = $region20
        $region19: #{tpu_custom_call.1} parent=11 // pred_region
          _
        $region20: #{tpu_custom_call.1} parent=11 // pred_fallthru
          _
        // Predicated region
        $region21: #{tpu_custom_call.1} parent=11 // pred_check
          %p418 = pneg %p172
        $region22: #{tpu_custom_call.1} parent=11 // pred_check_branch
          %420 = sbr.rel (%p418) target = $region24
        $region23: #{tpu_custom_call.1} parent=11 // pred_region
          %s422 = ssub.s32 2048, 2048
          %423 = vsyncadd [#allocation9], %s422
          %s424 = sshll.u32 [#allocation8], 4
          %s425 = int_to_ptr.vmem [resolvable:$true] %s424
          %430 = dma.hbm_to_vmem [thread:$0]  %s5, 2048, %s425, [#allocation9], 64, 64, 4
        $region24: #{tpu_custom_call.1} parent=11 // pred_fallthru
          _
        // Predicated region
        $region25: #{tpu_custom_call.1} parent=11 // pred_check
          %p431 = pneg %p193
        $region26: #{tpu_custom_call.1} parent=11 // pred_check_branch
          %433 = sbr.rel (%p431) target = $region28
        $region27: #{tpu_custom_call.1} parent=11 // pred_region
          _
        $region28: #{tpu_custom_call.1} parent=11 // pred_fallthru
          _
        // Predicated region
        $region29: #{tpu_custom_call.1} parent=11 // pred_check
          %p434 = pneg %p214
        $region30: #{tpu_custom_call.1} parent=11 // pred_check_branch
          %436 = sbr.rel (%p434) target = $region32
        $region31: #{tpu_custom_call.1} parent=11 // pred_region
          %s438 = ssub.s32 1024, 1024
          %439 = vsyncadd [#allocation9], %s438
          %s440 = sshll.u32 [#allocation10], 4
          %s441 = int_to_ptr.vmem [resolvable:$true] %s440
          %446 = dma.hbm_to_vmem [thread:$0]  %s7, 1024, %s441, [#allocation9], 64, 64, 4
        $region32: #{tpu_custom_call.1} parent=11 // pred_fallthru
          _
        // Predicated region
        $region33: #{tpu_custom_call.1} parent=11 // pred_check
          %p447 = pneg %p235
        $region34: #{tpu_custom_call.1} parent=11 // pred_check_branch
          %449 = sbr.rel (%p447) target = $region36
        $region35: #{tpu_custom_call.1} parent=11 // pred_region
          %s451 = ssub.s32 1024, 1024
          %452 = vsyncadd [#allocation12], %s451
          %s453 = sshll.u32 [#allocation11], 4
          %s454 = int_to_ptr.vmem [resolvable:$true] %s453
          %459 = dma.hbm_to_vmem [thread:$0]  %s8, 1024, %s454, [#allocation12], 64, 64, 4
        $region36: #{tpu_custom_call.1} parent=11 // pred_fallthru
          _
        // Predicated region
        $region37: #{tpu_custom_call.1} parent=11 // pred_check
          %p460 = pneg %p256
        $region38: #{tpu_custom_call.1} parent=11 // pred_check_branch
          %462 = sbr.rel (%p460) target = $region40
        $region39: #{tpu_custom_call.1} parent=11 // pred_region
          %s464 = ssub.s32 1024, 1024
          %465 = vsyncadd [#allocation12], %s464
          %s466 = sshll.u32 [#allocation13], 4
          %s467 = int_to_ptr.vmem [resolvable:$true] %s466
          %472 = dma.hbm_to_vmem [thread:$0]  %s9, 1024, %s467, [#allocation12], 64, 64, 4
        $region40: #{tpu_custom_call.1} parent=11 // pred_fallthru
          _
        // Predicated region
        $region41: #{tpu_custom_call.1} parent=11 // pred_check
          %p473 = pneg %p277
        $region42: #{tpu_custom_call.1} parent=11 // pred_check_branch
          %475 = sbr.rel (%p473) target = $region44
        $region43: #{tpu_custom_call.1} parent=11 // pred_region
          _
        $region44: #{tpu_custom_call.1} parent=11 // pred_fallthru
          _
        // Predicated region
        $region45: #{tpu_custom_call.1} parent=11 // pred_check
          %p476 = pneg %p298
        $region46: #{tpu_custom_call.1} parent=11 // pred_check_branch
          %478 = sbr.rel (%p476) target = $region48
        $region47: #{tpu_custom_call.1} parent=11 // pred_region
          _
        $region48: #{tpu_custom_call.1} parent=11 // pred_fallthru
          _
        // Predicated region
        $region49: #{tpu_custom_call.1} parent=11 // pred_check
          %p479 = pneg %p319
        $region50: #{tpu_custom_call.1} parent=11 // pred_check_branch
          %481 = sbr.rel (%p479) target = $region52
        $region51: #{tpu_custom_call.1} parent=11 // pred_region
          _
        $region52: #{tpu_custom_call.1} parent=11 // pred_fallthru
          _
        // Predicated region
        $region53: #{tpu_custom_call.1} parent=11 // pred_check
          %p482 = pneg %p340
        $region54: #{tpu_custom_call.1} parent=11 // pred_check_branch
          %484 = sbr.rel (%p482) target = $region56
        $region55: #{tpu_custom_call.1} parent=11 // pred_region
          _
        $region56: #{tpu_custom_call.1} parent=11 // pred_fallthru
          _
        // Predicated region
        $region57: #{tpu_custom_call.1} parent=11 // pred_check
          %p485 = pneg %p361
        $region58: #{tpu_custom_call.1} parent=11 // pred_check_branch
          %487 = sbr.rel (%p485) target = $region60
        $region59: #{tpu_custom_call.1} parent=11 // pred_region
          _
        $region60: #{tpu_custom_call.1} parent=11 // pred_fallthru
          _
      $region12: #{tpu_custom_call.1} parent=5 // pred_fallthru
        _
      %p488 = scmp.lt.s32.totalorder %s31, 3
      // Predicated region
      $region61: #{tpu_custom_call.1} parent=5 // pred_check
        %p489 = pneg %p488
      $region62: #{tpu_custom_call.1} parent=5 // pred_check_branch
        %491 = sbr.rel (%p489) target = $region64
      $region63: #{tpu_custom_call.1} parent=5 // pred_region
        // Predicated region
        $region65: #{tpu_custom_call.1} parent=63 // pred_check
          %p492 = pneg %p51
        $region66: #{tpu_custom_call.1} parent=63 // pred_check_branch
          %494 = sbr.rel (%p492) target = $region68
        $region67: #{tpu_custom_call.1} parent=63 // pred_region
          %s495 = sand.u32 %s41, 1
          %s496 = scalar_lea.sflag [#allocation4], %s495
          %s497 = sand.u32 %s41, 1
          %s498 = smul.addr %s497, 16
          %s499 = scalar_lea.vmem [#allocation3], %s498
          %s500 = smul.u32 2, %s31
          %s502 = ssub.s32 256, 256
          %503 = vsyncadd %s496, %s502
          %s504 = smul.addr %s500, 128
          %s505 = scalar_lea.hbm %s0, %s504
          %s506 = sshll.u32 %s499, 4
          %s507 = int_to_ptr.vmem [resolvable:$true] %s506
          %512 = dma.hbm_to_vmem [thread:$0]  %s505, 256, %s507, %s496, 128, 128, 8
        $region68: #{tpu_custom_call.1} parent=63 // pred_fallthru
          _
        // Predicated region
        $region69: #{tpu_custom_call.1} parent=63 // pred_check
          %p513 = pneg %p77
        $region70: #{tpu_custom_call.1} parent=63 // pred_check_branch
          %515 = sbr.rel (%p513) target = $region72
        $region71: #{tpu_custom_call.1} parent=63 // pred_region
          %s516 = sand.u32 %s31, 1
          %s517 = scalar_lea.sflag [#allocation6], %s516
          %s518 = sand.u32 %s67, 1
          %s519 = smul.addr %s518, 16
          %s520 = scalar_lea.vmem [#allocation5], %s519
          %s521 = smul.u32 2, %s31
          %s523 = ssub.s32 256, 256
          %524 = vsyncadd %s517, %s523
          %s525 = smul.addr %s521, 128
          %s526 = scalar_lea.hbm %s1, %s525
          %s527 = sshll.u32 %s520, 4
          %s528 = int_to_ptr.vmem [resolvable:$true] %s527
          %533 = dma.hbm_to_vmem [thread:$0]  %s526, 256, %s528, %s517, 128, 128, 8
        $region72: #{tpu_custom_call.1} parent=63 // pred_fallthru
          _
        // Predicated region
        $region73: #{tpu_custom_call.1} parent=63 // pred_check
          %p534 = pneg %p103
        $region74: #{tpu_custom_call.1} parent=63 // pred_check_branch
          %536 = sbr.rel (%p534) target = $region76
        $region75: #{tpu_custom_call.1} parent=63 // pred_region
          %s537 = smul.u32 2, %s31
          %p538 = scmp.lt.s32.totalorder %s537, 5
          %s539 = scalar_select %p538, %s537, 5
          %s540 = smul.addr %s539, 2
          %s541 = smul.addr %s540, 8
          %s542 = scalar_lea.vmem %s2, %s541
          %s543 = smul.u32 2, %s31
        $region76: #{tpu_custom_call.1} parent=63 // pred_fallthru
          _
      $region64: #{tpu_custom_call.1} parent=5 // pred_fallthru
        _
      %p544 = scmp.le.s32.totalorder 1, %s31
      %p545 = scmp.lt.s32.totalorder %s31, 4
      %p546 = pnand %p544, %p545
      %p547 = pneg %p546
      // Predicated region
      $region77: #{tpu_custom_call.1} parent=5 // pred_check
        _
      $region78: #{tpu_custom_call.1} parent=5 // pred_check_branch
        %549 = sbr.rel (%p546) target = $region80
      $region79: #{tpu_custom_call.1} parent=5 // pred_region
        %s550 = ssub.s32 %s31, 1
        %s551 = sand.u32 %s44, 1
        %s552 = scalar_lea.sflag [#allocation4], %s551
        %s553 = sand.u32 %s44, 1
        %s554 = smul.addr %s553, 16
        %s555 = scalar_lea.vmem [#allocation3], %s554
        // Predicated region
        $region81: #{tpu_custom_call.1} parent=79 // pred_check
          %p556 = pneg %p57
        $region82: #{tpu_custom_call.1} parent=79 // pred_check_branch
          %558 = sbr.rel (%p556) target = $region84
        $region83: #{tpu_custom_call.1} parent=79 // pred_region
          %559 = dma.done %s552, 256
        $region84: #{tpu_custom_call.1} parent=79 // pred_fallthru
          _
        %s560 = sand.u32 %s36, 1
        %s561 = scalar_lea.sflag [#allocation6], %s560
        %s562 = sand.u32 %s70, 1
        %s563 = smul.addr %s562, 16
        %s564 = scalar_lea.vmem [#allocation5], %s563
        // Predicated region
        $region85: #{tpu_custom_call.1} parent=79 // pred_check
          %p565 = pneg %p83
        $region86: #{tpu_custom_call.1} parent=79 // pred_check_branch
          %567 = sbr.rel (%p565) target = $region88
        $region87: #{tpu_custom_call.1} parent=79 // pred_region
          %568 = dma.done %s561, 256
        $region88: #{tpu_custom_call.1} parent=79 // pred_fallthru
          _
        // Predicated region
        $region89: #{tpu_custom_call.1} parent=79 // pred_check
          %p569 = pneg %p130
        $region90: #{tpu_custom_call.1} parent=79 // pred_check_branch
          %571 = sbr.rel (%p569) target = $region92
        $region91: #{tpu_custom_call.1} parent=79 // pred_region
          %572 = dma.done [#allocation6], 1024
        $region92: #{tpu_custom_call.1} parent=79 // pred_fallthru
          _
        // Predicated region
        $region93: #{tpu_custom_call.1} parent=79 // pred_check
          %p573 = pneg %p172
        $region94: #{tpu_custom_call.1} parent=79 // pred_check_branch
          %575 = sbr.rel (%p573) target = $region96
        $region95: #{tpu_custom_call.1} parent=79 // pred_region
          %576 = dma.done [#allocation9], 2048
        $region96: #{tpu_custom_call.1} parent=79 // pred_fallthru
          _
        // Predicated region
        $region97: #{tpu_custom_call.1} parent=79 // pred_check
          %p577 = pneg %p214
        $region98: #{tpu_custom_call.1} parent=79 // pred_check_branch
          %579 = sbr.rel (%p577) target = $region100
        $region99: #{tpu_custom_call.1} parent=79 // pred_region
          %580 = dma.done [#allocation9], 1024
        $region100: #{tpu_custom_call.1} parent=79 // pred_fallthru
          _
        // Predicated region
        $region101: #{tpu_custom_call.1} parent=79 // pred_check
          %p581 = pneg %p235
        $region102: #{tpu_custom_call.1} parent=79 // pred_check_branch
          %583 = sbr.rel (%p581) target = $region104
        $region103: #{tpu_custom_call.1} parent=79 // pred_region
          %584 = dma.done [#allocation12], 1024
        $region104: #{tpu_custom_call.1} parent=79 // pred_fallthru
          _
        // Predicated region
        $region105: #{tpu_custom_call.1} parent=79 // pred_check
          %p585 = pneg %p256
        $region106: #{tpu_custom_call.1} parent=79 // pred_check_branch
          %587 = sbr.rel (%p585) target = $region108
        $region107: #{tpu_custom_call.1} parent=79 // pred_region
          %588 = dma.done [#allocation12], 1024
        $region108: #{tpu_custom_call.1} parent=79 // pred_fallthru
          _
        %s589 = sand.u32 %s44, 1
        %s590 = scalar_lea.sflag [#allocation4], %s589
        %s591 = sand.u32 %s44, 1
        %s592 = smul.addr %s591, 16
        %s593 = scalar_lea.vmem [#allocation3], %s592
        %p594 = pneg %p57
        %p595 = pneg %p54
        %s596 = sand.u32 %s36, 1
        %s597 = scalar_lea.sflag [#allocation6], %s596
        %s598 = sand.u32 %s70, 1
        %s599 = smul.addr %s598, 16
        %s600 = scalar_lea.vmem [#allocation5], %s599
        %p601 = pneg %p83
        %p602 = pneg %p80
        %s603 = smul.u32 2, %s36
        %p604 = scmp.lt.s32.totalorder %s603, 5
        %s605 = scalar_select %p604, %s603, 5
        %s606 = smul.addr %s605, 2
        %s607 = smul.addr %s606, 8
        %s608 = scalar_lea.vmem %s2, %s607
        %p609 = pneg %p109
        %p610 = pneg %p106
        %p611 = pneg %p130
        %p612 = pneg %p127
        %p613 = pneg %p151
        %p614 = pneg %p148
        %p615 = pneg %p172
        %p616 = pneg %p169
        %p617 = pneg %p193
        %p618 = pneg %p190
        %p619 = pneg %p214
        %p620 = pneg %p211
        %p621 = pneg %p235
        %p622 = pneg %p232
        %p623 = pneg %p256
        %p624 = pneg %p253
        %p625 = pneg %p277
        %p626 = pneg %p274
        %p627 = pneg %p298
        %p628 = pneg %p295
        %p629 = pneg %p319
        %p630 = pneg %p316
        %p631 = pneg %p340
        %p632 = pneg %p337
        %p633 = pneg %p361
        %p634 = pneg %p358
        %p635 = pneg %p387
        %p636 = pneg %p384
        %s637 = smul.u32 2, %s36
        %p638 = scmp.lt.s32.totalorder %s637, 5
        %s639 = scalar_select %p638, %s637, 5
        %s640 = smul.addr %s639, 8
        %s641 = scalar_lea.vmem %s15, %s640
        %s642 = smul.u32 2, %s36
        %s643 = smul.u32 2, %s36
        %s644 = smul.u32 2, %s36
        %p645 = scmp.lt.s32.totalorder %s644, 5
        %s646 = scalar_select %p645, %s644, 5
        %s647 = smul.addr %s646, 2
        %s648 = smul.addr %s647, 8
        %s649 = scalar_lea.vmem %s2, %s648
        %s650 = smul.u32 2, %s36
        %s651 = smul.u32 2, %s36
        %p652 = scmp.lt.s32.totalorder %s651, 5
        %s653 = scalar_select %p652, %s651, 5
        %s654 = smul.addr %s653, 8
        %s655 = scalar_lea.vmem %s15, %s654
        %s656 = smul.u32 2, %s36
        %v658 = vld [vmem:[#allocation7] sm:$0xf]
        %v659 = vld [vmem:[#allocation7 + $0x4] sm:$0xf]
        %v660 = vld [vmem:[#allocation7 + $0x8] sm:$0xf]
        %v661 = vld [vmem:[#allocation7 + $0xc] sm:$0xf]
        %v662 = vld [vmem:[#allocation7 + $0x10] sm:$0xf]
        %v663 = vld [vmem:[#allocation7 + $0x14] sm:$0xf]
        %v664 = vld [vmem:[#allocation7 + $0x18] sm:$0xf]
        %v665 = vld [vmem:[#allocation7 + $0x1c] sm:$0xf]
        %v666 = vld [vmem:[#allocation7 + $0x20] sm:$0xf]
        %v667 = vld [vmem:[#allocation7 + $0x24] sm:$0xf]
        %v668 = vld [vmem:[#allocation7 + $0x28] sm:$0xf]
        %v669 = vld [vmem:[#allocation7 + $0x2c] sm:$0xf]
        %v670 = vld [vmem:[#allocation7 + $0x30] sm:$0xf]
        %v671 = vld [vmem:[#allocation7 + $0x34] sm:$0xf]
        %v672 = vld [vmem:[#allocation7 + $0x38] sm:$0xf]
        %v673 = vld [vmem:[#allocation7 + $0x3c] sm:$0xf]
        %v674 = vld [vmem:[%s4] sm:$0x1]
        %v675 = vld [vmem:[#allocation8] sm:$0xf]
        %v676 = vld [vmem:[#allocation8 + $0x4] sm:$0xf]
        %v677 = vld [vmem:[#allocation8 + $0x8] sm:$0xf]
        %v678 = vld [vmem:[#allocation8 + $0xc] sm:$0xf]
        %v679 = vld [vmem:[#allocation8 + $0x10] sm:$0xf]
        %v680 = vld [vmem:[#allocation8 + $0x14] sm:$0xf]
        %v681 = vld [vmem:[#allocation8 + $0x18] sm:$0xf]
        %v682 = vld [vmem:[#allocation8 + $0x1c] sm:$0xf]
        %v683 = vld [vmem:[#allocation8 + $0x20] sm:$0xf]
        %v684 = vld [vmem:[#allocation8 + $0x24] sm:$0xf]
        %v685 = vld [vmem:[#allocation8 + $0x28] sm:$0xf]
        %v686 = vld [vmem:[#allocation8 + $0x2c] sm:$0xf]
        %v687 = vld [vmem:[#allocation8 + $0x30] sm:$0xf]
        %v688 = vld [vmem:[#allocation8 + $0x34] sm:$0xf]
        %v689 = vld [vmem:[#allocation8 + $0x38] sm:$0xf]
        %v690 = vld [vmem:[#allocation8 + $0x3c] sm:$0xf]
        %v691 = vld [vmem:[#allocation8 + $0x40] sm:$0xf]
        %v692 = vld [vmem:[#allocation8 + $0x44] sm:$0xf]
        %v693 = vld [vmem:[#allocation8 + $0x48] sm:$0xf]
        %v694 = vld [vmem:[#allocation8 + $0x4c] sm:$0xf]
        %v695 = vld [vmem:[#allocation8 + $0x50] sm:$0xf]
        %v696 = vld [vmem:[#allocation8 + $0x54] sm:$0xf]
        %v697 = vld [vmem:[#allocation8 + $0x58] sm:$0xf]
        %v698 = vld [vmem:[#allocation8 + $0x5c] sm:$0xf]
        %v699 = vld [vmem:[#allocation8 + $0x60] sm:$0xf]
        %v700 = vld [vmem:[#allocation8 + $0x64] sm:$0xf]
        %v701 = vld [vmem:[#allocation8 + $0x68] sm:$0xf]
        %v702 = vld [vmem:[#allocation8 + $0x6c] sm:$0xf]
        %v703 = vld [vmem:[#allocation8 + $0x70] sm:$0xf]
        %v704 = vld [vmem:[#allocation8 + $0x74] sm:$0xf]
        %v705 = vld [vmem:[#allocation8 + $0x78] sm:$0xf]
        %v706 = vld [vmem:[#allocation8 + $0x7c] sm:$0xf]
        %v707 = vld [vmem:[%s6] sm:$0x1]
        %v708 = vld [vmem:[%s555] sm:$0xff]
        %v709 = vld [vmem:[%s555 + $0x8] sm:$0xff]
        %v710 = vld [vmem:[%s564] sm:$0xff]
        %v711 = vld [vmem:[%s564 + $0x8] sm:$0xff]
        %v712 = vpack.c.bf16 %v709, %v708
        %v713 = vpack.c.bf16 %v711, %v710
        %v715 = vlaneseq
        %v716 = vshrl.u32 %v715, 7
        %v717 = vsub.s32 0, %v716
        %v718 = vrot.slane %v674, %v717
        %v736 = vunpack.c.l.b16 %v658
        %v737 = vunpack.c.l.b16 %v659
        %v738 = vunpack.c.l.b16 %v660
        %v739 = vunpack.c.l.b16 %v661
        %v740 = vunpack.c.l.b16 %v662
        %v741 = vunpack.c.l.b16 %v663
        %v742 = vunpack.c.l.b16 %v664
        %v743 = vunpack.c.l.b16 %v665
        %v744 = vunpack.c.l.b16 %v666
        %v745 = vunpack.c.l.b16 %v667
        %v746 = vunpack.c.l.b16 %v668
        %v747 = vunpack.c.l.b16 %v669
        %v748 = vunpack.c.l.b16 %v670
        %v749 = vunpack.c.l.b16 %v671
        %v750 = vunpack.c.l.b16 %v672
        %v751 = vunpack.c.l.b16 %v673
        %v752 = vpack.c.b16 %v737, %v736
        %v753 = vpack.c.b16 %v739, %v738
        %v754 = vpack.c.b16 %v741, %v740
        %v755 = vpack.c.b16 %v743, %v742
        %v756 = vpack.c.b16 %v745, %v744
        %v757 = vpack.c.b16 %v747, %v746
        %v758 = vpack.c.b16 %v749, %v748
        %v759 = vpack.c.b16 %v751, %v750
        %768 = vmatprep.subr.bf16.mxu0 0
        %769 = vmatpush1.bf16.msra.mxu0 %v759
        %770 = vmatprep.subr.bf16.mxu0 0
        %771 = vmatpush1.bf16.msra.mxu0 %v758
        %772 = vmatprep.subr.bf16.mxu0 0
        %773 = vmatpush1.bf16.msra.mxu0 %v757
        %774 = vmatprep.subr.bf16.mxu0 0
        %775 = vmatpush1.bf16.msra.mxu0 %v756
        %776 = vmatprep.subr.bf16.mxu0 0
        %777 = vmatpush1.bf16.msra.mxu0 %v755
        %778 = vmatprep.subr.bf16.mxu0 0
        %779 = vmatpush1.bf16.msra.mxu0 %v754
        %780 = vmatprep.subr.bf16.mxu0 0
        %781 = vmatpush1.bf16.msra.mxu0 %v753
        %782 = vmatprep.subr.bf16.mxu0 0
        %783 = vmatpush1.bf16.msra.mxu0 %v752
        %784 = vmatprep.subr.bf16.mxu0 0
        %785 = vmatpush2.bf16.msra.mxu0 0
        %786 = vmatprep.subr.bf16.mxu0 0
        %787 = vmatpush2.bf16.msra.mxu0 0
        %788 = vmatprep.subr.bf16.mxu0 0
        %789 = vmatpush2.bf16.msra.mxu0 0
        %790 = vmatprep.subr.bf16.mxu0 0
        %791 = vmatpush2.bf16.msra.mxu0 0
        %792 = vmatprep.subr.bf16.mxu0 0
        %793 = vmatpush2.bf16.msra.mxu0 0
        %794 = vmatprep.subr.bf16.mxu0 0
        %795 = vmatpush2.bf16.msra.mxu0 0
        %796 = vmatprep.subr.bf16.mxu0 0
        %797 = vmatpush2.bf16.msra.mxu0 0
        %798 = vmatprep.subr.bf16.mxu0 0
        %799 = vmatpush2.bf16.msra.mxu0 0
        %800 = vmatprep.mubr.bf16.mxu0 0
        %801 = vmatmul.mubr.bf16.gmra.mxu0 %v712
        %v802 = vpop.f32.mrf.mxu0
        %v803 = vadd.f32 %v718, %v802
        %v804 = vpop.f32.mrf.mxu0
        %v805 = vpop.f32.mrf.mxu0
        %v806 = vadd.f32 %v718, %v805
        %v807 = vpop.f32.mrf.mxu0
        %808 = vmatprep.mubr.bf16.mxu0 0
        %809 = vmatmul.mubr.bf16.gmra.mxu0 %v713
        %v810 = vpop.f32.mrf.mxu0
        %v811 = vadd.f32 %v718, %v810
        %v812 = vpop.f32.mrf.mxu0
        %v813 = vpop.f32.mrf.mxu0
        %v814 = vadd.f32 %v718, %v813
        %v815 = vpop.f32.mrf.mxu0
        %816 = vdwg.mxu0
        %v817 = vld [vmem:[%s649] sm:$0xff]
        %v818 = vld [vmem:[%s649 + $0x8] sm:$0xff]
        %v819 = vld [vmem:[%s649 + $0x10] sm:$0xff]
        %v820 = vld [vmem:[%s649 + $0x18] sm:$0xff]
        %v821 = vpack.c.bf16 %v819, %v817
        %v822 = vpack.c.bf16 %v820, %v818
        %v824 = vlaneseq
        %v825 = vshrl.u32 %v824, 7
        %v826 = vsub.s32 0, %v825
        %v827 = vrot.slane %v707, %v826
        %v861 = vunpack.c.l.b16 %v675
        %v862 = vunpack.c.l.b16 %v676
        %v863 = vunpack.c.l.b16 %v677
        %v864 = vunpack.c.l.b16 %v678
        %v865 = vunpack.c.l.b16 %v679
        %v866 = vunpack.c.l.b16 %v680
        %v867 = vunpack.c.l.b16 %v681
        %v868 = vunpack.c.l.b16 %v682
        %v869 = vunpack.c.l.b16 %v683
        %v870 = vunpack.c.l.b16 %v684
        %v871 = vunpack.c.l.b16 %v685
        %v872 = vunpack.c.l.b16 %v686
        %v873 = vunpack.c.l.b16 %v687
        %v874 = vunpack.c.l.b16 %v688
        %v875 = vunpack.c.l.b16 %v689
        %v876 = vunpack.c.l.b16 %v690
        %v877 = vunpack.c.l.b16 %v691
        %v878 = vunpack.c.l.b16 %v692
        %v879 = vunpack.c.l.b16 %v693
        %v880 = vunpack.c.l.b16 %v694
        %v881 = vunpack.c.l.b16 %v695
        %v882 = vunpack.c.l.b16 %v696
        %v883 = vunpack.c.l.b16 %v697
        %v884 = vunpack.c.l.b16 %v698
        %v885 = vunpack.c.l.b16 %v699
        %v886 = vunpack.c.l.b16 %v700
        %v887 = vunpack.c.l.b16 %v701
        %v888 = vunpack.c.l.b16 %v702
        %v889 = vunpack.c.l.b16 %v703
        %v890 = vunpack.c.l.b16 %v704
        %v891 = vunpack.c.l.b16 %v705
        %v892 = vunpack.c.l.b16 %v706
        %v893 = vpack.c.b16 %v862, %v861
        %v894 = vpack.c.b16 %v864, %v863
        %v895 = vpack.c.b16 %v866, %v865
        %v896 = vpack.c.b16 %v868, %v867
        %v897 = vpack.c.b16 %v870, %v869
        %v898 = vpack.c.b16 %v872, %v871
        %v899 = vpack.c.b16 %v874, %v873
        %v900 = vpack.c.b16 %v876, %v875
        %v901 = vpack.c.b16 %v878, %v877
        %v902 = vpack.c.b16 %v880, %v879
        %v903 = vpack.c.b16 %v882, %v881
        %v904 = vpack.c.b16 %v884, %v883
        %v905 = vpack.c.b16 %v886, %v885
        %v906 = vpack.c.b16 %v888, %v887
        %v907 = vpack.c.b16 %v890, %v889
        %v908 = vpack.c.b16 %v892, %v891
        %925 = vmatprep.subr.bf16.mxu0 0
        %926 = vmatpush1.bf16.msra.mxu0 %v900
        %927 = vmatprep.subr.bf16.mxu0 0
        %928 = vmatpush1.bf16.msra.mxu0 %v899
        %929 = vmatprep.subr.bf16.mxu0 0
        %930 = vmatpush1.bf16.msra.mxu0 %v898
        %931 = vmatprep.subr.bf16.mxu0 0
        %932 = vmatpush1.bf16.msra.mxu0 %v897
        %933 = vmatprep.subr.bf16.mxu0 0
        %934 = vmatpush1.bf16.msra.mxu0 %v896
        %935 = vmatprep.subr.bf16.mxu0 0
        %936 = vmatpush1.bf16.msra.mxu0 %v895
        %937 = vmatprep.subr.bf16.mxu0 0
        %938 = vmatpush1.bf16.msra.mxu0 %v894
        %939 = vmatprep.subr.bf16.mxu0 0
        %940 = vmatpush1.bf16.msra.mxu0 %v893
        %941 = vmatprep.subr.bf16.mxu0 0
        %942 = vmatpush2.bf16.msra.mxu0 %v908
        %943 = vmatprep.subr.bf16.mxu0 0
        %944 = vmatpush2.bf16.msra.mxu0 %v907
        %945 = vmatprep.subr.bf16.mxu0 0
        %946 = vmatpush2.bf16.msra.mxu0 %v906
        %947 = vmatprep.subr.bf16.mxu0 0
        %948 = vmatpush2.bf16.msra.mxu0 %v905
        %949 = vmatprep.subr.bf16.mxu0 0
        %950 = vmatpush2.bf16.msra.mxu0 %v904
        %951 = vmatprep.subr.bf16.mxu0 0
        %952 = vmatpush2.bf16.msra.mxu0 %v903
        %953 = vmatprep.subr.bf16.mxu0 0
        %954 = vmatpush2.bf16.msra.mxu0 %v902
        %955 = vmatprep.subr.bf16.mxu0 0
        %956 = vmatpush2.bf16.msra.mxu0 %v901
        %957 = vmatprep.mubr.bf16.mxu0 %v822
        %958 = vmatmul.mubr.bf16.gmra.mxu0 %v821
        %v959 = vpop.f32.mrf.mxu0
        %v960 = vadd.f32 %v827, %v959
        %v961 = vpop.f32.mrf.mxu0
        %v962 = vpop.f32.mrf.mxu0
        %v963 = vadd.f32 %v827, %v962
        %v964 = vpop.f32.mrf.mxu0
        %965 = vdwg.mxu0
        %v966 = vpack.c.bf16 %v806, %v803
        %v967 = vld [vmem:[#allocation10] sm:$0xf]
        %v968 = vld [vmem:[#allocation10 + $0x4] sm:$0xf]
        %v969 = vld [vmem:[#allocation10 + $0x8] sm:$0xf]
        %v970 = vld [vmem:[#allocation10 + $0xc] sm:$0xf]
        %v971 = vld [vmem:[#allocation10 + $0x10] sm:$0xf]
        %v972 = vld [vmem:[#allocation10 + $0x14] sm:$0xf]
        %v973 = vld [vmem:[#allocation10 + $0x18] sm:$0xf]
        %v974 = vld [vmem:[#allocation10 + $0x1c] sm:$0xf]
        %v975 = vld [vmem:[#allocation10 + $0x20] sm:$0xf]
        %v976 = vld [vmem:[#allocation10 + $0x24] sm:$0xf]
        %v977 = vld [vmem:[#allocation10 + $0x28] sm:$0xf]
        %v978 = vld [vmem:[#allocation10 + $0x2c] sm:$0xf]
        %v979 = vld [vmem:[#allocation10 + $0x30] sm:$0xf]
        %v980 = vld [vmem:[#allocation10 + $0x34] sm:$0xf]
        %v981 = vld [vmem:[#allocation10 + $0x38] sm:$0xf]
        %v982 = vld [vmem:[#allocation10 + $0x3c] sm:$0xf]
        %v983 = vpack.c.bf16 %v814, %v811
        %v984 = vld [vmem:[#allocation11] sm:$0xf]
        %v985 = vld [vmem:[#allocation11 + $0x4] sm:$0xf]
        %v986 = vld [vmem:[#allocation11 + $0x8] sm:$0xf]
        %v987 = vld [vmem:[#allocation11 + $0xc] sm:$0xf]
        %v988 = vld [vmem:[#allocation11 + $0x10] sm:$0xf]
        %v989 = vld [vmem:[#allocation11 + $0x14] sm:$0xf]
        %v990 = vld [vmem:[#allocation11 + $0x18] sm:$0xf]
        %v991 = vld [vmem:[#allocation11 + $0x1c] sm:$0xf]
        %v992 = vld [vmem:[#allocation11 + $0x20] sm:$0xf]
        %v993 = vld [vmem:[#allocation11 + $0x24] sm:$0xf]
        %v994 = vld [vmem:[#allocation11 + $0x28] sm:$0xf]
        %v995 = vld [vmem:[#allocation11 + $0x2c] sm:$0xf]
        %v996 = vld [vmem:[#allocation11 + $0x30] sm:$0xf]
        %v997 = vld [vmem:[#allocation11 + $0x34] sm:$0xf]
        %v998 = vld [vmem:[#allocation11 + $0x38] sm:$0xf]
        %v999 = vld [vmem:[#allocation11 + $0x3c] sm:$0xf]
        %v1016 = vunpack.c.l.b16 %v984
        %v1017 = vunpack.c.l.b16 %v985
        %v1018 = vunpack.c.l.b16 %v986
        %v1019 = vunpack.c.l.b16 %v987
        %v1020 = vunpack.c.l.b16 %v988
        %v1021 = vunpack.c.l.b16 %v989
        %v1022 = vunpack.c.l.b16 %v990
        %v1023 = vunpack.c.l.b16 %v991
        %v1024 = vunpack.c.l.b16 %v992
        %v1025 = vunpack.c.l.b16 %v993
        %v1026 = vunpack.c.l.b16 %v994
        %v1027 = vunpack.c.l.b16 %v995
        %v1028 = vunpack.c.l.b16 %v996
        %v1029 = vunpack.c.l.b16 %v997
        %v1030 = vunpack.c.l.b16 %v998
        %v1031 = vunpack.c.l.b16 %v999
        %v1032 = vpack.c.b16 %v1017, %v1016
        %v1033 = vpack.c.b16 %v1019, %v1018
        %v1034 = vpack.c.b16 %v1021, %v1020
        %v1035 = vpack.c.b16 %v1023, %v1022
        %v1036 = vpack.c.b16 %v1025, %v1024
        %v1037 = vpack.c.b16 %v1027, %v1026
        %v1038 = vpack.c.b16 %v1029, %v1028
        %v1039 = vpack.c.b16 %v1031, %v1030
        %1048 = vmatprep.subr.bf16.mxu0 0
        %1049 = vmatpush1.bf16.msra.mxu0 %v1039
        %1050 = vmatprep.subr.bf16.mxu0 0
        %1051 = vmatpush1.bf16.msra.mxu0 %v1038
        %1052 = vmatprep.subr.bf16.mxu0 0
        %1053 = vmatpush1.bf16.msra.mxu0 %v1037
        %1054 = vmatprep.subr.bf16.mxu0 0
        %1055 = vmatpush1.bf16.msra.mxu0 %v1036
        %1056 = vmatprep.subr.bf16.mxu0 0
        %1057 = vmatpush1.bf16.msra.mxu0 %v1035
        %1058 = vmatprep.subr.bf16.mxu0 0
        %1059 = vmatpush1.bf16.msra.mxu0 %v1034
        %1060 = vmatprep.subr.bf16.mxu0 0
        %1061 = vmatpush1.bf16.msra.mxu0 %v1033
        %1062 = vmatprep.subr.bf16.mxu0 0
        %1063 = vmatpush1.bf16.msra.mxu0 %v1032
        %1064 = vmatprep.subr.bf16.mxu0 0
        %1065 = vmatpush2.bf16.msra.mxu0 0
        %1066 = vmatprep.subr.bf16.mxu0 0
        %1067 = vmatpush2.bf16.msra.mxu0 0
        %1068 = vmatprep.subr.bf16.mxu0 0
        %1069 = vmatpush2.bf16.msra.mxu0 0
        %1070 = vmatprep.subr.bf16.mxu0 0
        %1071 = vmatpush2.bf16.msra.mxu0 0
        %1072 = vmatprep.subr.bf16.mxu0 0
        %1073 = vmatpush2.bf16.msra.mxu0 0
        %1074 = vmatprep.subr.bf16.mxu0 0
        %1075 = vmatpush2.bf16.msra.mxu0 0
        %1076 = vmatprep.subr.bf16.mxu0 0
        %1077 = vmatpush2.bf16.msra.mxu0 0
        %1078 = vmatprep.subr.bf16.mxu0 0
        %1079 = vmatpush2.bf16.msra.mxu0 0
        %1080 = vmatprep.mubr.bf16.mxu0 0
        %1081 = vmatmul.mubr.bf16.gmra.mxu0 %v983
        %v1082 = vpop.f32.mrf.mxu0
        %v1083 = vadd.f32 0.0, %v1082
        %v1084 = vpop.f32.mrf.mxu0
        %v1085 = vpop.f32.mrf.mxu0
        %v1086 = vadd.f32 0.0, %v1085
        %v1087 = vpop.f32.mrf.mxu0
        %1088 = vdwg.mxu0
        %v1105 = vunpack.c.l.b16 %v967
        %v1106 = vunpack.c.l.b16 %v968
        %v1107 = vunpack.c.l.b16 %v969
        %v1108 = vunpack.c.l.b16 %v970
        %v1109 = vunpack.c.l.b16 %v971
        %v1110 = vunpack.c.l.b16 %v972
        %v1111 = vunpack.c.l.b16 %v973
        %v1112 = vunpack.c.l.b16 %v974
        %v1113 = vunpack.c.l.b16 %v975
        %v1114 = vunpack.c.l.b16 %v976
        %v1115 = vunpack.c.l.b16 %v977
        %v1116 = vunpack.c.l.b16 %v978
        %v1117 = vunpack.c.l.b16 %v979
        %v1118 = vunpack.c.l.b16 %v980
        %v1119 = vunpack.c.l.b16 %v981
        %v1120 = vunpack.c.l.b16 %v982
        %v1121 = vpack.c.b16 %v1106, %v1105
        %v1122 = vpack.c.b16 %v1108, %v1107
        %v1123 = vpack.c.b16 %v1110, %v1109
        %v1124 = vpack.c.b16 %v1112, %v1111
        %v1125 = vpack.c.b16 %v1114, %v1113
        %v1126 = vpack.c.b16 %v1116, %v1115
        %v1127 = vpack.c.b16 %v1118, %v1117
        %v1128 = vpack.c.b16 %v1120, %v1119
        %1137 = vmatprep.subr.bf16.mxu0 0
        %1138 = vmatpush1.bf16.msra.mxu0 %v1128
        %1139 = vmatprep.subr.bf16.mxu0 0
        %1140 = vmatpush1.bf16.msra.mxu0 %v1127
        %1141 = vmatprep.subr.bf16.mxu0 0
        %1142 = vmatpush1.bf16.msra.mxu0 %v1126
        %1143 = vmatprep.subr.bf16.mxu0 0
        %1144 = vmatpush1.bf16.msra.mxu0 %v1125
        %1145 = vmatprep.subr.bf16.mxu0 0
        %1146 = vmatpush1.bf16.msra.mxu0 %v1124
        %1147 = vmatprep.subr.bf16.mxu0 0
        %1148 = vmatpush1.bf16.msra.mxu0 %v1123
        %1149 = vmatprep.subr.bf16.mxu0 0
        %1150 = vmatpush1.bf16.msra.mxu0 %v1122
        %1151 = vmatprep.subr.bf16.mxu0 0
        %1152 = vmatpush1.bf16.msra.mxu0 %v1121
        %1153 = vmatprep.subr.bf16.mxu0 0
        %1154 = vmatpush2.bf16.msra.mxu0 0
        %1155 = vmatprep.subr.bf16.mxu0 0
        %1156 = vmatpush2.bf16.msra.mxu0 0
        %1157 = vmatprep.subr.bf16.mxu0 0
        %1158 = vmatpush2.bf16.msra.mxu0 0
        %1159 = vmatprep.subr.bf16.mxu0 0
        %1160 = vmatpush2.bf16.msra.mxu0 0
        %1161 = vmatprep.subr.bf16.mxu0 0
        %1162 = vmatpush2.bf16.msra.mxu0 0
        %1163 = vmatprep.subr.bf16.mxu0 0
        %1164 = vmatpush2.bf16.msra.mxu0 0
        %1165 = vmatprep.subr.bf16.mxu0 0
        %1166 = vmatpush2.bf16.msra.mxu0 0
        %1167 = vmatprep.subr.bf16.mxu0 0
        %1168 = vmatpush2.bf16.msra.mxu0 0
        %1169 = vmatprep.mubr.bf16.mxu0 0
        %1170 = vmatmul.mubr.bf16.gmra.mxu0 %v966
        %v1171 = vpop.f32.mrf.mxu0
        %v1172 = vadd.f32 %v1083, %v1171
        %v1173 = vpop.f32.mrf.mxu0
        %v1174 = vpop.f32.mrf.mxu0
        %v1175 = vadd.f32 %v1086, %v1174
        %v1176 = vpop.f32.mrf.mxu0
        %1177 = vdwg.mxu0
        %v1178 = vpack.c.bf16 %v963, %v960
        %v1179 = vld [vmem:[#allocation13] sm:$0xf]
        %v1180 = vld [vmem:[#allocation13 + $0x4] sm:$0xf]
        %v1181 = vld [vmem:[#allocation13 + $0x8] sm:$0xf]
        %v1182 = vld [vmem:[#allocation13 + $0xc] sm:$0xf]
        %v1183 = vld [vmem:[#allocation13 + $0x10] sm:$0xf]
        %v1184 = vld [vmem:[#allocation13 + $0x14] sm:$0xf]
        %v1185 = vld [vmem:[#allocation13 + $0x18] sm:$0xf]
        %v1186 = vld [vmem:[#allocation13 + $0x1c] sm:$0xf]
        %v1187 = vld [vmem:[#allocation13 + $0x20] sm:$0xf]
        %v1188 = vld [vmem:[#allocation13 + $0x24] sm:$0xf]
        %v1189 = vld [vmem:[#allocation13 + $0x28] sm:$0xf]
        %v1190 = vld [vmem:[#allocation13 + $0x2c] sm:$0xf]
        %v1191 = vld [vmem:[#allocation13 + $0x30] sm:$0xf]
        %v1192 = vld [vmem:[#allocation13 + $0x34] sm:$0xf]
        %v1193 = vld [vmem:[#allocation13 + $0x38] sm:$0xf]
        %v1194 = vld [vmem:[#allocation13 + $0x3c] sm:$0xf]
        %v1211 = vunpack.c.l.b16 %v1179
        %v1212 = vunpack.c.l.b16 %v1180
        %v1213 = vunpack.c.l.b16 %v1181
        %v1214 = vunpack.c.l.b16 %v1182
        %v1215 = vunpack.c.l.b16 %v1183
        %v1216 = vunpack.c.l.b16 %v1184
        %v1217 = vunpack.c.l.b16 %v1185
        %v1218 = vunpack.c.l.b16 %v1186
        %v1219 = vunpack.c.l.b16 %v1187
        %v1220 = vunpack.c.l.b16 %v1188
        %v1221 = vunpack.c.l.b16 %v1189
        %v1222 = vunpack.c.l.b16 %v1190
        %v1223 = vunpack.c.l.b16 %v1191
        %v1224 = vunpack.c.l.b16 %v1192
        %v1225 = vunpack.c.l.b16 %v1193
        %v1226 = vunpack.c.l.b16 %v1194
        %v1227 = vpack.c.b16 %v1212, %v1211
        %v1228 = vpack.c.b16 %v1214, %v1213
        %v1229 = vpack.c.b16 %v1216, %v1215
        %v1230 = vpack.c.b16 %v1218, %v1217
        %v1231 = vpack.c.b16 %v1220, %v1219
        %v1232 = vpack.c.b16 %v1222, %v1221
        %v1233 = vpack.c.b16 %v1224, %v1223
        %v1234 = vpack.c.b16 %v1226, %v1225
        %1243 = vmatprep.subr.bf16.mxu0 0
        %1244 = vmatpush1.bf16.msra.mxu0 %v1234
        %1245 = vmatprep.subr.bf16.mxu0 0
        %1246 = vmatpush1.bf16.msra.mxu0 %v1233
        %1247 = vmatprep.subr.bf16.mxu0 0
        %1248 = vmatpush1.bf16.msra.mxu0 %v1232
        %1249 = vmatprep.subr.bf16.mxu0 0
        %1250 = vmatpush1.bf16.msra.mxu0 %v1231
        %1251 = vmatprep.subr.bf16.mxu0 0
        %1252 = vmatpush1.bf16.msra.mxu0 %v1230
        %1253 = vmatprep.subr.bf16.mxu0 0
        %1254 = vmatpush1.bf16.msra.mxu0 %v1229
        %1255 = vmatprep.subr.bf16.mxu0 0
        %1256 = vmatpush1.bf16.msra.mxu0 %v1228
        %1257 = vmatprep.subr.bf16.mxu0 0
        %1258 = vmatpush1.bf16.msra.mxu0 %v1227
        %1259 = vmatprep.subr.bf16.mxu0 0
        %1260 = vmatpush2.bf16.msra.mxu0 0
        %1261 = vmatprep.subr.bf16.mxu0 0
        %1262 = vmatpush2.bf16.msra.mxu0 0
        %1263 = vmatprep.subr.bf16.mxu0 0
        %1264 = vmatpush2.bf16.msra.mxu0 0
        %1265 = vmatprep.subr.bf16.mxu0 0
        %1266 = vmatpush2.bf16.msra.mxu0 0
        %1267 = vmatprep.subr.bf16.mxu0 0
        %1268 = vmatpush2.bf16.msra.mxu0 0
        %1269 = vmatprep.subr.bf16.mxu0 0
        %1270 = vmatpush2.bf16.msra.mxu0 0
        %1271 = vmatprep.subr.bf16.mxu0 0
        %1272 = vmatpush2.bf16.msra.mxu0 0
        %1273 = vmatprep.subr.bf16.mxu0 0
        %1274 = vmatpush2.bf16.msra.mxu0 0
        %1275 = vmatprep.mubr.bf16.mxu0 0
        %1276 = vmatmul.mubr.bf16.gmra.mxu0 %v1178
        %v1277 = vpop.f32.mrf.mxu0
        %v1278 = vadd.f32 0.0, %v1277
        %v1279 = vpop.f32.mrf.mxu0
        %v1280 = vpop.f32.mrf.mxu0
        %v1281 = vadd.f32 0.0, %v1280
        %v1282 = vpop.f32.mrf.mxu0
        %1283 = vdwg.mxu0
        %v1284 = vadd.f32 %v1172, %v1278
        %v1285 = vadd.f32 %v1175, %v1281
        %v1286 = vld [vmem:[%s10] sm:$0x1]
        %v1288 = vlaneseq
        %v1289 = vshrl.u32 %v1288, 7
        %v1290 = vsub.s32 0, %v1289
        %v1291 = vrot.slane %v1286, %v1290
        %v1293 = vadd.f32 %v1284, %v1291
        %v1294 = vadd.f32 %v1285, %v1291
        %v1295 = vmax.f32 %v1293, 0.0
        %v1296 = vmax.f32 %v1294, 0.0
        %v1297 = vpack.c.bf16 %v1296, %v1295
        %v1298 = vld [vmem:[%s11] sm:$0xf]
        %v1299 = vld [vmem:[%s11 + $0x4] sm:$0xf]
        %v1300 = vld [vmem:[%s11 + $0x8] sm:$0xf]
        %v1301 = vld [vmem:[%s11 + $0xc] sm:$0xf]
        %v1302 = vld [vmem:[%s11 + $0x10] sm:$0xf]
        %v1303 = vld [vmem:[%s11 + $0x14] sm:$0xf]
        %v1304 = vld [vmem:[%s11 + $0x18] sm:$0xf]
        %v1305 = vld [vmem:[%s11 + $0x1c] sm:$0xf]
        %v1306 = vld [vmem:[%s11 + $0x20] sm:$0xf]
        %v1307 = vld [vmem:[%s11 + $0x24] sm:$0xf]
        %v1308 = vld [vmem:[%s11 + $0x28] sm:$0xf]
        %v1309 = vld [vmem:[%s11 + $0x2c] sm:$0xf]
        %v1310 = vld [vmem:[%s11 + $0x30] sm:$0xf]
        %v1311 = vld [vmem:[%s11 + $0x34] sm:$0xf]
        %v1312 = vld [vmem:[%s11 + $0x38] sm:$0xf]
        %v1313 = vld [vmem:[%s11 + $0x3c] sm:$0xf]
        %v1314 = vld [vmem:[%s12] sm:$0x1]
        %v1316 = vlaneseq
        %v1317 = vshrl.u32 %v1316, 7
        %v1318 = vsub.s32 0, %v1317
        %v1319 = vrot.slane %v1314, %v1318
        %v1337 = vunpack.c.l.b16 %v1298
        %v1338 = vunpack.c.l.b16 %v1299
        %v1339 = vunpack.c.l.b16 %v1300
        %v1340 = vunpack.c.l.b16 %v1301
        %v1341 = vunpack.c.l.b16 %v1302
        %v1342 = vunpack.c.l.b16 %v1303
        %v1343 = vunpack.c.l.b16 %v1304
        %v1344 = vunpack.c.l.b16 %v1305
        %v1345 = vunpack.c.l.b16 %v1306
        %v1346 = vunpack.c.l.b16 %v1307
        %v1347 = vunpack.c.l.b16 %v1308
        %v1348 = vunpack.c.l.b16 %v1309
        %v1349 = vunpack.c.l.b16 %v1310
        %v1350 = vunpack.c.l.b16 %v1311
        %v1351 = vunpack.c.l.b16 %v1312
        %v1352 = vunpack.c.l.b16 %v1313
        %v1353 = vpack.c.b16 %v1338, %v1337
        %v1354 = vpack.c.b16 %v1340, %v1339
        %v1355 = vpack.c.b16 %v1342, %v1341
        %v1356 = vpack.c.b16 %v1344, %v1343
        %v1357 = vpack.c.b16 %v1346, %v1345
        %v1358 = vpack.c.b16 %v1348, %v1347
        %v1359 = vpack.c.b16 %v1350, %v1349
        %v1360 = vpack.c.b16 %v1352, %v1351
        %1369 = vmatprep.subr.bf16.mxu0 0
        %1370 = vmatpush1.bf16.msra.mxu0 %v1360
        %1371 = vmatprep.subr.bf16.mxu0 0
        %1372 = vmatpush1.bf16.msra.mxu0 %v1359
        %1373 = vmatprep.subr.bf16.mxu0 0
        %1374 = vmatpush1.bf16.msra.mxu0 %v1358
        %1375 = vmatprep.subr.bf16.mxu0 0
        %1376 = vmatpush1.bf16.msra.mxu0 %v1357
        %1377 = vmatprep.subr.bf16.mxu0 0
        %1378 = vmatpush1.bf16.msra.mxu0 %v1356
        %1379 = vmatprep.subr.bf16.mxu0 0
        %1380 = vmatpush1.bf16.msra.mxu0 %v1355
        %1381 = vmatprep.subr.bf16.mxu0 0
        %1382 = vmatpush1.bf16.msra.mxu0 %v1354
        %1383 = vmatprep.subr.bf16.mxu0 0
        %1384 = vmatpush1.bf16.msra.mxu0 %v1353
        %1385 = vmatprep.subr.bf16.mxu0 0
        %1386 = vmatpush2.bf16.msra.mxu0 0
        %1387 = vmatprep.subr.bf16.mxu0 0
        %1388 = vmatpush2.bf16.msra.mxu0 0
        %1389 = vmatprep.subr.bf16.mxu0 0
        %1390 = vmatpush2.bf16.msra.mxu0 0
        %1391 = vmatprep.subr.bf16.mxu0 0
        %1392 = vmatpush2.bf16.msra.mxu0 0
        %1393 = vmatprep.subr.bf16.mxu0 0
        %1394 = vmatpush2.bf16.msra.mxu0 0
        %1395 = vmatprep.subr.bf16.mxu0 0
        %1396 = vmatpush2.bf16.msra.mxu0 0
        %1397 = vmatprep.subr.bf16.mxu0 0
        %1398 = vmatpush2.bf16.msra.mxu0 0
        %1399 = vmatprep.subr.bf16.mxu0 0
        %1400 = vmatpush2.bf16.msra.mxu0 0
        %1401 = vmatprep.mubr.bf16.mxu0 0
        %1402 = vmatmul.mubr.bf16.gmra.mxu0 %v1297
        %v1403 = vpop.f32.mrf.mxu0
        %v1404 = vadd.f32 %v1319, %v1403
        %v1405 = vpop.f32.mrf.mxu0
        %v1406 = vpop.f32.mrf.mxu0
        %v1407 = vadd.f32 %v1319, %v1406
        %v1408 = vpop.f32.mrf.mxu0
        %1409 = vdwg.mxu0
        %v1410 = vmax.f32 %v1404, 0.0
        %v1411 = vmax.f32 %v1407, 0.0
        %v1412 = vld [vmem:[%s13] sm:$0x1]
        %v1414 = vlaneseq
        %v1415 = vshrl.u32 %v1414, 7
        %v1416 = vsub.s32 0, %v1415
        %v1417 = vrot.slane %v1412, %v1416
        %v1419 = vmul.f32 %v1410, %v1417
        %v1420 = vmul.f32 %v1411, %v1417
        %vm1421 = vcmask 523264
        %v1422 = vsel %vm1421, %v1419, 0.0
        %1423 = vadd.xlane.f32.xlu0 %v1422
        %v1424 = vpop.xlane.xlu0 %1423
        %v1425 = vsel %vm1421, %v1420, 0.0
        %1426 = vadd.xlane.f32.xlu0 %v1425
        %v1427 = vpop.xlane.xlu0 %1426
        %v1428 = vld [vmem:[#allocation2] sm:$0x1]
        %v1430 = vlaneseq
        %v1431 = vshrl.u32 %v1430, 7
        %v1432 = vsub.s32 0, %v1431
        %v1433 = vrot.slane %v1428, %v1432
        %v1435 = vadd.f32 %v1424, %v1433
        %v1436 = vadd.f32 %v1427, %v1433
        %vm1437 = vcmask 7168
        %1438 = vst.msk [vmem:[%s655] sm:$0xff] %vm1437, %v1435
        %1439 = vst.msk [vmem:[%s655 + $0x8] sm:$0xff] %vm1437, %v1436
        %s1440 = smul.u32 2, %s36
        %p1441 = scmp.lt.s32.totalorder %s1440, 5
        %s1442 = scalar_select %p1441, %s1440, 5
        %s1443 = smul.addr %s1442, 8
        %s1444 = scalar_lea.vmem %s15, %s1443
        // Predicated region
        $region109: #{tpu_custom_call.1} parent=79 // pred_check
          %p1445 = pneg %p384
        $region110: #{tpu_custom_call.1} parent=79 // pred_check_branch
          %1447 = sbr.rel (%p1445) target = $region112
        $region111: #{tpu_custom_call.1} parent=79 // pred_region
          %s1448 = smul.u32 2, %s36
        $region112: #{tpu_custom_call.1} parent=79 // pred_fallthru
          _
      $region80: #{tpu_custom_call.1} parent=5 // pred_fallthru
        _
      %p1449 = scmp.le.s32.totalorder 2, %s31
      // Predicated region
      $region113: #{tpu_custom_call.1} parent=5 // pred_check
        %p1450 = pneg %p1449
      $region114: #{tpu_custom_call.1} parent=5 // pred_check_branch
        %1452 = sbr.rel (%p1450) target = $region116
      $region115: #{tpu_custom_call.1} parent=5 // pred_region
        %s1453 = ssub.s32 %s31, 2
        // Predicated region
        $region117: #{tpu_custom_call.1} parent=115 // pred_check
          %p1454 = pneg %p390
        $region118: #{tpu_custom_call.1} parent=115 // pred_check_branch
          %1456 = sbr.rel (%p1454) target = $region120
        $region119: #{tpu_custom_call.1} parent=115 // pred_region
          %s1457 = smul.u32 2, %s37
          %p1458 = scmp.lt.s32.totalorder %s1457, 5
          %s1459 = scalar_select %p1458, %s1457, 5
          %s1460 = smul.addr %s1459, 8
          %s1461 = scalar_lea.vmem %s15, %s1460
        $region120: #{tpu_custom_call.1} parent=115 // pred_fallthru
          _
      $region116: #{tpu_custom_call.1} parent=5 // pred_fallthru
        _
    $region6: #{tpu_custom_call.1} parent=1 // loop_footer
      %s35 = sadd.s32 1, %s31
    $region7: #{tpu_custom_call.1} parent=1 // loop_footer_branch
      %30 = sbr.rel target = $region3
    $region8: #{tpu_custom_call.1} parent=1 // loop_exit
      _
    %1462 = vsyncpa [#allocation4], 1
    %s1463 = scalar_lea.sflag [#allocation4], 1
    %1464 = vsyncpa %s1463, 1
    %1465 = vsyncpa [#allocation6], 1
    %s1466 = scalar_lea.sflag [#allocation6], 1
    %1467 = vsyncpa %s1466, 1
    %1468 = vsyncpa [#allocation9], 1
    %1469 = vsyncpa [#allocation12], 1

</llo_original>
